<compile_context>
chip_gen: v7x
topology: tpu7x:2x2x1
jax: 0.10.0
libtpu: 0.0.40
codegen_flags: <defaults>
</compile_context>

<pallas_src>
import functools
import math

import jax
import jax.numpy as jnp
from jax import lax
from jax.experimental import pallas as pl
from jax.experimental.pallas import tpu as pltpu


# ----------------------------------------------------------------------------
# Fused kernel: one grid step == one batch element (all heads, full layer).
# ----------------------------------------------------------------------------
def _layer_kernel(x_ref, wqkv_ref, bqkv_ref, wo_ref, bo_ref, w1_ref, w2_ref,
                  o_ref, *, num_heads, head_dim, sm_scale):
    H, D = num_heads, head_dim
    C = H * D

    xb = x_ref[...]                                             # (S, C) f32 residual

    # Fused q/k/v Linear + MHA in_proj: one (S,C)x(C,3C) matmul, bias in f32.
    qkv = jnp.dot(xb.astype(jnp.bfloat16), wqkv_ref[...],
                  preferred_element_type=jnp.float32) + bqkv_ref[...]   # (S, 3C) f32
    qkv = qkv.astype(jnp.bfloat16)

    # Per-head scaled-dot-product attention (static, unrolled head loop).
    heads = []
    for h in range(H):
        q = qkv[:, h * D:(h + 1) * D]                           # (S, D)
        k = qkv[:, C + h * D:C + (h + 1) * D]                   # (S, D)
        v = qkv[:, 2 * C + h * D:2 * C + (h + 1) * D]           # (S, D)
        s = lax.dot_general(q, k, (((1,), (1,)), ((), ())),
                            preferred_element_type=jnp.float32) * sm_scale  # (S, S)
        m = jnp.max(s, axis=-1, keepdims=True)
        p = jnp.exp(s - m)
        l = jnp.sum(p, axis=-1, keepdims=True)
        p = p * pl.reciprocal(l, approx=False)                  # exact softmax denom
        heads.append(jnp.dot(p.astype(jnp.bfloat16), v,
                             preferred_element_type=jnp.float32))          # (S, D)
    attn = jnp.concatenate(heads, axis=-1).astype(jnp.bfloat16)            # (S, C)

    # out_proj + attention residual (f32).
    x1 = (jnp.dot(attn, wo_ref[...], preferred_element_type=jnp.float32)
          + bo_ref[...] + xb)                                               # (S, C) f32

    # MLP: fc2(fc1(x1)) + x1 — intermediates never leave VMEM.
    h1 = jnp.dot(x1.astype(jnp.bfloat16), w1_ref[...],
                 preferred_element_type=jnp.float32)
    x2 = jnp.dot(h1.astype(jnp.bfloat16), w2_ref[...],
                 preferred_element_type=jnp.float32) + x1

    o_ref[...] = x2.astype(o_ref.dtype)                         # lane-dense (S, C) store


# ----------------------------------------------------------------------------
# Wrapper.
# ----------------------------------------------------------------------------
def transformer_layer(folded, x, num_heads):
    S, B, C = x.shape
    H = num_heads
    assert C % H == 0, "embed dim must divide num_heads"
    D = C // H
    # Lane/sublane-dense per-batch blocks (S, C); see header for larger-shape note.
    assert S % 8 == 0 and C % 128 == 0, "demo kernel expects S%8==0 and C%128==0"

    # Free, row-major reshape: (S, B, C) -> (S, B*C); batch b owns columns [b*C,(b+1)*C).
    x2d = x.reshape(S, B * C).astype(jnp.float32)

    const = lambda b: (0, 0)
    out2d = pl.pallas_call(
        functools.partial(_layer_kernel, num_heads=H, head_dim=D,
                          sm_scale=1.0 / math.sqrt(D)),
        out_shape=jax.ShapeDtypeStruct((S, B * C), jnp.float32),
        grid_spec=pltpu.PrefetchScalarGridSpec(
            num_scalar_prefetch=0,
            grid=(B,),                                           # >=2 parallel steps
            in_specs=[
                pl.BlockSpec((S, C), lambda b: (0, b)),          # x, per-batch slab
                pl.BlockSpec((C, 3 * C), const),                 # folded qkv weight
                pl.BlockSpec((1, 3 * C), const),                 # in_proj bias
                pl.BlockSpec((C, C), const),                     # out_proj weight
                pl.BlockSpec((1, C), const),                     # out_proj bias
                pl.BlockSpec((C, C), const),                     # fc1 weight
                pl.BlockSpec((C, C), const),                     # fc2 weight
            ],
            out_specs=pl.BlockSpec((S, C), lambda b: (0, b)),
        ),
        compiler_params=pltpu.CompilerParams(
            dimension_semantics=("parallel",),                   # shard batches across TCs
        ),
    )(x2d, folded["w_qkv"], folded["b_qkv"], folded["w_out"], folded["b_out"],
      folded["w_fc1"], folded["w_fc2"])

    return out2d.reshape(S, B, C)


# ----------------------------------------------------------------------------
# Parameter init (deterministic, synthetic).  Weights stored in matmul layout
# (in_features, out_features).  Biases zero, matching PyTorch's MHA default init.
# ----------------------------------------------------------------------------
def init_params(key, c):
    ks = jax.random.split(key, 7)

    def lin(k, fan_in, shape):
        bound = 1.0 / math.sqrt(fan_in)
        return jax.random.uniform(k, shape, jnp.float32, -bound, bound)

    p = {}
    p["q_w"] = lin(ks[0], c, (c, c))            # nn.Linear(c, c, bias=False)
    p["k_w"] = lin(ks[1], c, (c, c))
    p["v_w"] = lin(ks[2], c, (c, c))
    p["in_proj_w"] = lin(ks[3], c, (c, 3 * c))  # MultiheadAttention in_proj
    p["in_proj_b"] = jnp.zeros((3 * c,), jnp.float32)
    p["out_proj_w"] = lin(ks[4], c, (c, c))
    p["out_proj_b"] = jnp.zeros((c,), jnp.float32)
    p["fc1_w"] = lin(ks[5], c, (c, c))          # nn.Linear(c, c, bias=False)
    p["fc2_w"] = lin(ks[6], c, (c, c))
    return p


def fold_params(p, c):
    """Host-side, once (outside the jitted forward): fold q/k/v Linears into the
    MHA in_proj (exact linear-of-linear) and cast matmul weight operands to bf16."""
    w_qkv = jnp.concatenate(
        [p["q_w"] @ p["in_proj_w"][:, :c],
         p["k_w"] @ p["in_proj_w"][:, c:2 * c],
         p["v_w"] @ p["in_proj_w"][:, 2 * c:]], axis=1)          # (C, 3C)
    return {
        "w_qkv": w_qkv.astype(jnp.bfloat16),
        "b_qkv": p["in_proj_b"].reshape(1, 3 * c).astype(jnp.float32),
        "w_out": p["out_proj_w"].astype(jnp.bfloat16),
        "b_out": p["out_proj_b"].reshape(1, c).astype(jnp.float32),
        "w_fc1": p["fc1_w"].astype(jnp.bfloat16),
        "w_fc2": p["fc2_w"].astype(jnp.bfloat16),
    }


# ----------------------------------------------------------------------------
# Pure-JAX f32 reference (mirrors the PyTorch module exactly) for a sanity check.
# ----------------------------------------------------------------------------
def reference(p, x, num_heads):
    S, B, C = x.shape
    H = num_heads
    D = C // H
    q = x @ p["q_w"]
    k = x @ p["k_w"]
    v = x @ p["v_w"]
    qi = q @ p["in_proj_w"][:, :C] + p["in_proj_b"][:C]
    ki = k @ p["in_proj_w"][:, C:2 * C] + p["in_proj_b"][C:2 * C]
    vi = v @ p["in_proj_w"][:, 2 * C:] + p["in_proj_b"][2 * C:]

    def split(t):  # (S,B,C) -> (B,H,S,D)
        return t.reshape(S, B, H, D).transpose(1, 2, 0, 3)

    qh, kh, vh = split(qi), split(ki), split(vi)
    s = jnp.einsum("bhsd,bhtd->bhst", qh, kh) / math.sqrt(D)
    pr = jax.nn.softmax(s, axis=-1)
    o = jnp.einsum("bhst,bhtd->bhsd", pr, vh)
    o = o.transpose(2, 0, 1, 3).reshape(S, B, C)
    x1 = o @ p["out_proj_w"] + p["out_proj_b"] + x
    x2 = (x1 @ p["fc1_w"]) @ p["fc2_w"] + x1
    return x2


if __name__ == "__main__":
    # Small, lane-dense demo shapes: seq=64, batch=2, embed=128, heads=4 (head_dim=32).
    S, B, C, H = 64, 2, 128, 4
    key = jax.random.PRNGKey(0)
    kx, kp = jax.random.split(key)
    x = jax.random.normal(kx, (S, B, C), jnp.float32)
    params = init_params(kp, C)
    folded = fold_params(params, C)          # once, outside the jitted forward

    fwd = jax.jit(functools.partial(transformer_layer, num_heads=H))
    out = jax.block_until_ready(fwd(folded, x))

    assert out.shape == (S, B, C)
    assert bool(jnp.all(jnp.isfinite(out)))
    # bf16 MXU operands vs f32 reference -> loose tolerance.
    ref = reference(params, x, H)
    max_err = float(jnp.max(jnp.abs(out - ref)))
    assert max_err < 0.25, f"max abs err {max_err}"
    print("KERNEL_OK")
</pallas_src>

<mosaic_0001>
module attributes {stable_mosaic.version = 11 : i64} {
  func.func @_layer_kernel(%arg0: i32, %arg1: memref<64x128xf32, #tpu.memory_space<vmem>>, %arg2: memref<128x384xbf16, #tpu.memory_space<vmem>>, %arg3: memref<1x384xf32, #tpu.memory_space<vmem>>, %arg4: memref<128x128xbf16, #tpu.memory_space<vmem>>, %arg5: memref<1x128xf32, #tpu.memory_space<vmem>>, %arg6: memref<128x128xbf16, #tpu.memory_space<vmem>>, %arg7: memref<128x128xbf16, #tpu.memory_space<vmem>>, %arg8: memref<64x128xf32, #tpu.memory_space<vmem>>) attributes {dimension_semantics = [#tpu.dimension_semantics<parallel>], iteration_bounds = array<i64: 2>, scalar_prefetch = 0 : i64, scratch_operands = 0 : i64, tpu.core_type = #tpu.core_type<tc>, window_params = [{transform_indices = @transform_0, window_bounds = array<i64: 64, 128>}, {pipeline_mode = #tpu.pipeline_mode<synchronous>, transform_indices = @transform_1, window_bounds = array<i64: 128, 384>}, {pipeline_mode = #tpu.pipeline_mode<synchronous>, transform_indices = @transform_2, window_bounds = array<i64: 1, 384>}, {pipeline_mode = #tpu.pipeline_mode<synchronous>, transform_indices = @transform_3, window_bounds = array<i64: 128, 128>}, {pipeline_mode = #tpu.pipeline_mode<synchronous>, transform_indices = @transform_4, window_bounds = array<i64: 1, 128>}, {pipeline_mode = #tpu.pipeline_mode<synchronous>, transform_indices = @transform_5, window_bounds = array<i64: 128, 128>}, {pipeline_mode = #tpu.pipeline_mode<synchronous>, transform_indices = @transform_6, window_bounds = array<i64: 128, 128>}, {transform_indices = @transform_7, window_bounds = array<i64: 64, 128>}]} {
    %c0 = arith.constant 0 : index
    %c0_0 = arith.constant 0 : index
    %0 = vector.load %arg1[%c0, %c0_0] : memref<64x128xf32, #tpu.memory_space<vmem>>, vector<64x128xf32>
    %1 = arith.truncf %0 : vector<64x128xf32> to vector<64x128xbf16>
    %c0_1 = arith.constant 0 : index
    %c0_2 = arith.constant 0 : index
    %2 = vector.load %arg2[%c0_1, %c0_2] : memref<128x384xbf16, #tpu.memory_space<vmem>>, vector<128x384xbf16>
    %cst = arith.constant dense<0.000000e+00> : vector<64x384xf32>
    %3 = tpu.matmul %1, %2, %cst {dimension_numbers = #tpu.dot_dimension_numbers<[1], [0], [0], [1], [0, 0, 1, 1], [], []>} : vector<64x128xbf16>, vector<128x384xbf16>, vector<64x384xf32> -> vector<64x384xf32>
    %c0_3 = arith.constant 0 : index
    %c0_4 = arith.constant 0 : index
    %4 = vector.load %arg3[%c0_3, %c0_4] : memref<1x384xf32, #tpu.memory_space<vmem>>, vector<1x384xf32>
    %5 = vector.broadcast %4 : vector<1x384xf32> to vector<64x384xf32>
    %6 = arith.addf %3, %5 : vector<64x384xf32>
    %7 = arith.truncf %6 : vector<64x384xf32> to vector<64x384xbf16>
    %8 = vector.extract_strided_slice %7 {offsets = [0, 0], sizes = [64, 32], strides = [1, 1]} : vector<64x384xbf16> to vector<64x32xbf16>
    %9 = vector.extract_strided_slice %7 {offsets = [0, 128], sizes = [64, 32], strides = [1, 1]} : vector<64x384xbf16> to vector<64x32xbf16>
    %10 = vector.extract_strided_slice %7 {offsets = [0, 256], sizes = [64, 32], strides = [1, 1]} : vector<64x384xbf16> to vector<64x32xbf16>
    %cst_5 = arith.constant dense<0.000000e+00> : vector<64x64xf32>
    %11 = tpu.matmul %8, %9, %cst_5 {dimension_numbers = #tpu.dot_dimension_numbers<[1], [1], [0], [0], [0, 0, 1, 0], [], []>} : vector<64x32xbf16>, vector<64x32xbf16>, vector<64x64xf32> -> vector<64x64xf32>
    %cst_6 = arith.constant 0.176776692 : f32
    %12 = vector.broadcast %cst_6 : f32 to vector<64x64xf32>
    %13 = arith.mulf %11, %12 : vector<64x64xf32>
    %cst_7 = arith.constant dense<0xFF800000> : vector<64xf32>
    %14 = vector.multi_reduction <maximumf>, %13, %cst_7 [1] : vector<64x64xf32> to vector<64xf32>
    %15 = vector.shape_cast %14 : vector<64xf32> to vector<64x1xf32>
    %16 = vector.broadcast %15 : vector<64x1xf32> to vector<64x64xf32>
    %17 = arith.subf %13, %16 : vector<64x64xf32>
    %18 = math.exp %17 : vector<64x64xf32>
    %cst_8 = arith.constant dense<0.000000e+00> : vector<64xf32>
    %19 = vector.multi_reduction <add>, %18, %cst_8 [1] : vector<64x64xf32> to vector<64xf32>
    %20 = vector.shape_cast %19 : vector<64xf32> to vector<64x1xf32>
    %21 = tpu.reciprocal %20 : vector<64x1xf32> -> vector<64x1xf32>
    %22 = vector.broadcast %21 : vector<64x1xf32> to vector<64x64xf32>
    %23 = arith.mulf %18, %22 : vector<64x64xf32>
    %24 = arith.truncf %23 : vector<64x64xf32> to vector<64x64xbf16>
    %cst_9 = arith.constant dense<0.000000e+00> : vector<64x32xf32>
    %25 = tpu.matmul %24, %10, %cst_9 {dimension_numbers = #tpu.dot_dimension_numbers<[1], [0], [0], [1], [0, 0, 1, 1], [], []>} : vector<64x64xbf16>, vector<64x32xbf16>, vector<64x32xf32> -> vector<64x32xf32>
    %26 = vector.extract_strided_slice %7 {offsets = [0, 32], sizes = [64, 32], strides = [1, 1]} : vector<64x384xbf16> to vector<64x32xbf16>
    %27 = vector.extract_strided_slice %7 {offsets = [0, 160], sizes = [64, 32], strides = [1, 1]} : vector<64x384xbf16> to vector<64x32xbf16>
    %28 = vector.extract_strided_slice %7 {offsets = [0, 288], sizes = [64, 32], strides = [1, 1]} : vector<64x384xbf16> to vector<64x32xbf16>
    %cst_10 = arith.constant dense<0.000000e+00> : vector<64x64xf32>
    %29 = tpu.matmul %26, %27, %cst_10 {dimension_numbers = #tpu.dot_dimension_numbers<[1], [1], [0], [0], [0, 0, 1, 0], [], []>} : vector<64x32xbf16>, vector<64x32xbf16>, vector<64x64xf32> -> vector<64x64xf32>
    %cst_11 = arith.constant 0.176776692 : f32
    %30 = vector.broadcast %cst_11 : f32 to vector<64x64xf32>
    %31 = arith.mulf %29, %30 : vector<64x64xf32>
    %cst_12 = arith.constant dense<0xFF800000> : vector<64xf32>
    %32 = vector.multi_reduction <maximumf>, %31, %cst_12 [1] : vector<64x64xf32> to vector<64xf32>
    %33 = vector.shape_cast %32 : vector<64xf32> to vector<64x1xf32>
    %34 = vector.broadcast %33 : vector<64x1xf32> to vector<64x64xf32>
    %35 = arith.subf %31, %34 : vector<64x64xf32>
    %36 = math.exp %35 : vector<64x64xf32>
    %cst_13 = arith.constant dense<0.000000e+00> : vector<64xf32>
    %37 = vector.multi_reduction <add>, %36, %cst_13 [1] : vector<64x64xf32> to vector<64xf32>
    %38 = vector.shape_cast %37 : vector<64xf32> to vector<64x1xf32>
    %39 = tpu.reciprocal %38 : vector<64x1xf32> -> vector<64x1xf32>
    %40 = vector.broadcast %39 : vector<64x1xf32> to vector<64x64xf32>
    %41 = arith.mulf %36, %40 : vector<64x64xf32>
    %42 = arith.truncf %41 : vector<64x64xf32> to vector<64x64xbf16>
    %cst_14 = arith.constant dense<0.000000e+00> : vector<64x32xf32>
    %43 = tpu.matmul %42, %28, %cst_14 {dimension_numbers = #tpu.dot_dimension_numbers<[1], [0], [0], [1], [0, 0, 1, 1], [], []>} : vector<64x64xbf16>, vector<64x32xbf16>, vector<64x32xf32> -> vector<64x32xf32>
    %44 = vector.extract_strided_slice %7 {offsets = [0, 64], sizes = [64, 32], strides = [1, 1]} : vector<64x384xbf16> to vector<64x32xbf16>
    %45 = vector.extract_strided_slice %7 {offsets = [0, 192], sizes = [64, 32], strides = [1, 1]} : vector<64x384xbf16> to vector<64x32xbf16>
    %46 = vector.extract_strided_slice %7 {offsets = [0, 320], sizes = [64, 32], strides = [1, 1]} : vector<64x384xbf16> to vector<64x32xbf16>
    %cst_15 = arith.constant dense<0.000000e+00> : vector<64x64xf32>
    %47 = tpu.matmul %44, %45, %cst_15 {dimension_numbers = #tpu.dot_dimension_numbers<[1], [1], [0], [0], [0, 0, 1, 0], [], []>} : vector<64x32xbf16>, vector<64x32xbf16>, vector<64x64xf32> -> vector<64x64xf32>
    %cst_16 = arith.constant 0.176776692 : f32
    %48 = vector.broadcast %cst_16 : f32 to vector<64x64xf32>
    %49 = arith.mulf %47, %48 : vector<64x64xf32>
    %cst_17 = arith.constant dense<0xFF800000> : vector<64xf32>
    %50 = vector.multi_reduction <maximumf>, %49, %cst_17 [1] : vector<64x64xf32> to vector<64xf32>
    %51 = vector.shape_cast %50 : vector<64xf32> to vector<64x1xf32>
    %52 = vector.broadcast %51 : vector<64x1xf32> to vector<64x64xf32>
    %53 = arith.subf %49, %52 : vector<64x64xf32>
    %54 = math.exp %53 : vector<64x64xf32>
    %cst_18 = arith.constant dense<0.000000e+00> : vector<64xf32>
    %55 = vector.multi_reduction <add>, %54, %cst_18 [1] : vector<64x64xf32> to vector<64xf32>
    %56 = vector.shape_cast %55 : vector<64xf32> to vector<64x1xf32>
    %57 = tpu.reciprocal %56 : vector<64x1xf32> -> vector<64x1xf32>
    %58 = vector.broadcast %57 : vector<64x1xf32> to vector<64x64xf32>
    %59 = arith.mulf %54, %58 : vector<64x64xf32>
    %60 = arith.truncf %59 : vector<64x64xf32> to vector<64x64xbf16>
    %cst_19 = arith.constant dense<0.000000e+00> : vector<64x32xf32>
    %61 = tpu.matmul %60, %46, %cst_19 {dimension_numbers = #tpu.dot_dimension_numbers<[1], [0], [0], [1], [0, 0, 1, 1], [], []>} : vector<64x64xbf16>, vector<64x32xbf16>, vector<64x32xf32> -> vector<64x32xf32>
    %62 = vector.extract_strided_slice %7 {offsets = [0, 96], sizes = [64, 32], strides = [1, 1]} : vector<64x384xbf16> to vector<64x32xbf16>
    %63 = vector.extract_strided_slice %7 {offsets = [0, 224], sizes = [64, 32], strides = [1, 1]} : vector<64x384xbf16> to vector<64x32xbf16>
    %64 = vector.extract_strided_slice %7 {offsets = [0, 352], sizes = [64, 32], strides = [1, 1]} : vector<64x384xbf16> to vector<64x32xbf16>
    %cst_20 = arith.constant dense<0.000000e+00> : vector<64x64xf32>
    %65 = tpu.matmul %62, %63, %cst_20 {dimension_numbers = #tpu.dot_dimension_numbers<[1], [1], [0], [0], [0, 0, 1, 0], [], []>} : vector<64x32xbf16>, vector<64x32xbf16>, vector<64x64xf32> -> vector<64x64xf32>
    %cst_21 = arith.constant 0.176776692 : f32
    %66 = vector.broadcast %cst_21 : f32 to vector<64x64xf32>
    %67 = arith.mulf %65, %66 : vector<64x64xf32>
    %cst_22 = arith.constant dense<0xFF800000> : vector<64xf32>
    %68 = vector.multi_reduction <maximumf>, %67, %cst_22 [1] : vector<64x64xf32> to vector<64xf32>
    %69 = vector.shape_cast %68 : vector<64xf32> to vector<64x1xf32>
    %70 = vector.broadcast %69 : vector<64x1xf32> to vector<64x64xf32>
    %71 = arith.subf %67, %70 : vector<64x64xf32>
    %72 = math.exp %71 : vector<64x64xf32>
    %cst_23 = arith.constant dense<0.000000e+00> : vector<64xf32>
    %73 = vector.multi_reduction <add>, %72, %cst_23 [1] : vector<64x64xf32> to vector<64xf32>
    %74 = vector.shape_cast %73 : vector<64xf32> to vector<64x1xf32>
    %75 = tpu.reciprocal %74 : vector<64x1xf32> -> vector<64x1xf32>
    %76 = vector.broadcast %75 : vector<64x1xf32> to vector<64x64xf32>
    %77 = arith.mulf %72, %76 : vector<64x64xf32>
    %78 = arith.truncf %77 : vector<64x64xf32> to vector<64x64xbf16>
    %cst_24 = arith.constant dense<0.000000e+00> : vector<64x32xf32>
    %79 = tpu.matmul %78, %64, %cst_24 {dimension_numbers = #tpu.dot_dimension_numbers<[1], [0], [0], [1], [0, 0, 1, 1], [], []>} : vector<64x64xbf16>, vector<64x32xbf16>, vector<64x32xf32> -> vector<64x32xf32>
    %80 = tpu.concatenate %25, %43, %61, %79 in 1 : vector<64x32xf32>, vector<64x32xf32>, vector<64x32xf32>, vector<64x32xf32> -> vector<64x128xf32>
    %81 = arith.truncf %80 : vector<64x128xf32> to vector<64x128xbf16>
    %c0_25 = arith.constant 0 : index
    %c0_26 = arith.constant 0 : index
    %82 = vector.load %arg4[%c0_25, %c0_26] : memref<128x128xbf16, #tpu.memory_space<vmem>>, vector<128x128xbf16>
    %cst_27 = arith.constant dense<0.000000e+00> : vector<64x128xf32>
    %83 = tpu.matmul %81, %82, %cst_27 {dimension_numbers = #tpu.dot_dimension_numbers<[1], [0], [0], [1], [0, 0, 1, 1], [], []>} : vector<64x128xbf16>, vector<128x128xbf16>, vector<64x128xf32> -> vector<64x128xf32>
    %c0_28 = arith.constant 0 : index
    %c0_29 = arith.constant 0 : index
    %84 = vector.load %arg5[%c0_28, %c0_29] : memref<1x128xf32, #tpu.memory_space<vmem>>, vector<1x128xf32>
    %85 = vector.broadcast %84 : vector<1x128xf32> to vector<64x128xf32>
    %86 = arith.addf %83, %85 : vector<64x128xf32>
    %87 = arith.addf %86, %0 : vector<64x128xf32>
    %88 = arith.truncf %87 : vector<64x128xf32> to vector<64x128xbf16>
    %c0_30 = arith.constant 0 : index
    %c0_31 = arith.constant 0 : index
    %89 = vector.load %arg6[%c0_30, %c0_31] : memref<128x128xbf16, #tpu.memory_space<vmem>>, vector<128x128xbf16>
    %cst_32 = arith.constant dense<0.000000e+00> : vector<64x128xf32>
    %90 = tpu.matmul %88, %89, %cst_32 {dimension_numbers = #tpu.dot_dimension_numbers<[1], [0], [0], [1], [0, 0, 1, 1], [], []>} : vector<64x128xbf16>, vector<128x128xbf16>, vector<64x128xf32> -> vector<64x128xf32>
    %91 = arith.truncf %90 : vector<64x128xf32> to vector<64x128xbf16>
    %c0_33 = arith.constant 0 : index
    %c0_34 = arith.constant 0 : index
    %92 = vector.load %arg7[%c0_33, %c0_34] : memref<128x128xbf16, #tpu.memory_space<vmem>>, vector<128x128xbf16>
    %cst_35 = arith.constant dense<0.000000e+00> : vector<64x128xf32>
    %93 = tpu.matmul %91, %92, %cst_35 {dimension_numbers = #tpu.dot_dimension_numbers<[1], [0], [0], [1], [0, 0, 1, 1], [], []>} : vector<64x128xbf16>, vector<128x128xbf16>, vector<64x128xf32> -> vector<64x128xf32>
    %94 = arith.addf %93, %87 : vector<64x128xf32>
    %c0_36 = arith.constant 0 : index
    %c0_37 = arith.constant 0 : index
    %95 = vector.load %arg8[%c0_36, %c0_37] : memref<64x128xf32, #tpu.memory_space<vmem>>, vector<64x128xf32>
    tpu.vector_store %arg8[%c0_36, %c0_37], %94 {strides = array<i32>} : memref<64x128xf32, #tpu.memory_space<vmem>>, vector<64x128xf32>,
    return
  }
  func.func @transform_0(%arg0: i32) -> (i32, i32) {
    %c0_i32 = arith.constant 0 : i32
    %c0_i32_0 = arith.constant 0 : i32
    return %c0_i32, %arg0 : i32, i32
  }
  func.func @transform_1(%arg0: i32) -> (i32, i32) {
    %c0_i32 = arith.constant 0 : i32
    %c0_i32_0 = arith.constant 0 : i32
    %c0_i32_1 = arith.constant 0 : i32
    return %c0_i32, %c0_i32_0 : i32, i32
  }
  func.func @transform_2(%arg0: i32) -> (i32, i32) {
    %c0_i32 = arith.constant 0 : i32
    %c0_i32_0 = arith.constant 0 : i32
    %c0_i32_1 = arith.constant 0 : i32
    return %c0_i32, %c0_i32_0 : i32, i32
  }
  func.func @transform_3(%arg0: i32) -> (i32, i32) {
    %c0_i32 = arith.constant 0 : i32
    %c0_i32_0 = arith.constant 0 : i32
    %c0_i32_1 = arith.constant 0 : i32
    return %c0_i32, %c0_i32_0 : i32, i32
  }
  func.func @transform_4(%arg0: i32) -> (i32, i32) {
    %c0_i32 = arith.constant 0 : i32
    %c0_i32_0 = arith.constant 0 : i32
    %c0_i32_1 = arith.constant 0 : i32
    return %c0_i32, %c0_i32_0 : i32, i32
  }
  func.func @transform_5(%arg0: i32) -> (i32, i32) {
    %c0_i32 = arith.constant 0 : i32
    %c0_i32_0 = arith.constant 0 : i32
    %c0_i32_1 = arith.constant 0 : i32
    return %c0_i32, %c0_i32_0 : i32, i32
  }
  func.func @transform_6(%arg0: i32) -> (i32, i32) {
    %c0_i32 = arith.constant 0 : i32
    %c0_i32_0 = arith.constant 0 : i32
    %c0_i32_1 = arith.constant 0 : i32
    return %c0_i32, %c0_i32_0 : i32, i32
  }
  func.func @transform_7(%arg0: i32) -> (i32, i32) {
    %c0_i32 = arith.constant 0 : i32
    %c0_i32_0 = arith.constant 0 : i32
    return %c0_i32, %arg0 : i32, i32
  }
}

</mosaic_0001>

<llo_original>
// kernel: transformer_layer.1
$region0: #{transformer_layer.1}
  #allocation0 [shape = 'u32[]', space=smem, size = 0x4, offset = 0x4, fixed_abs, tag = 'smem constant byte address 0x4 - core index']
  #allocation1 [shape = 'u32[144,128]{1,0:T(1,128)}', space=vmem, size = 0x12000, scoped, tag = 'internal scratch']
  %s0 = inlined_call_operand.vmem [shape: f32[64,256], index: 0, kind: input, shape index: {}]
  %s1 = inlined_call_operand.vmem [shape: bf16[128,384], index: 1, kind: input, shape index: {}]
  %s2 = inlined_call_operand.vmem [shape: f32[1,384], index: 2, kind: input, shape index: {}]
  %s3 = inlined_call_operand.vmem [shape: bf16[128,128], index: 3, kind: input, shape index: {}]
  %s4 = inlined_call_operand.vmem [shape: f32[1,128], index: 4, kind: input, shape index: {}]
  %s5 = inlined_call_operand.hbm [shape: bf16[128,128], index: 5, kind: input, shape index: {}]
  %s6 = inlined_call_operand.hbm [shape: bf16[128,128], index: 6, kind: input, shape index: {}]
  %s7 = inlined_call_operand.vmem [shape: f32[64,256], index: 7, kind: output, shape index: {}]
  %s8 = sld [smem:[#allocation0]]
  $region141: #{transformer_layer.1} parent=0
    _
  %s10 = ssub.s32 1, %s8
  %s11 = scalar_select 0, %s10, %s8
  $region1: #{transformer_layer.1} parent=0
    #allocation2 [shape = 'u8[65536]{0}', space=vmem, size = 0x10000, scoped, tag = 'input window, operand 0']
    #allocation3 [shape = 'u8[32768]{0}', space=vmem, size = 0x8000, scoped, tag = 'input window, operand 5, single buffered']
    #allocation4 [shape = 's32[2]{0}', space=sflag, size = 0x8, scoped, tag = 'scoped memory for transformer_layer.1']
    #allocation5 [shape = 'u8[32768]{0}', space=vmem, size = 0x8000, scoped, tag = 'input window, operand 6, single buffered']
    #allocation6 [shape = 's32[1]{0}', space=sflag, size = 0x4, scoped, tag = 'scoped memory for transformer_layer.1']
    #allocation7 [shape = 'u8[65536]{0}', space=vmem, size = 0x10000, scoped, tag = 'output window, operand 0']
    %12 = vsyncpa [#allocation4], 0
    %13 = vsyncpa [#allocation6], 0
    loop: start=0, step=1, limit=4
    $region2: #{transformer_layer.1} parent=1 // loop_pre_header
      _
    $region3: #{transformer_layer.1} parent=1 // loop_header
      %s15 = sphi 0, %s19
      %p16 = scmp.ge.s32.totalorder %s15, 4
      %s25 = sphi 0, %s27
      %s28 = sphi 0, %s25
      %s29 = sphi 0, %s28
      %s45 = sphi 0, %s29
      %s49 = sphi 0, %s49
      %s51 = sphi 0, %s49
      %s52 = sphi 0, %s51
      %s66 = sphi 0, %s52
      %s70 = sphi 0, %s70
      %s72 = sphi 0, %s70
      %s73 = sphi 0, %s72
      %s87 = sphi 0, %s73
      %s91 = sphi 0, %s91
      %s93 = sphi 0, %s91
      %s94 = sphi 0, %s93
      %s108 = sphi 0, %s94
      %s112 = sphi 0, %s112
      %s114 = sphi 0, %s112
      %s115 = sphi 0, %s114
      %s129 = sphi 0, %s115
      %s133 = sphi 0, %s133
      %s135 = sphi 0, %s133
      %s136 = sphi 0, %s135
      %s150 = sphi 0, %s136
      %s154 = sphi 0, %s154
      %s156 = sphi 0, %s154
      %s157 = sphi 0, %s156
      %s171 = sphi 0, %s157
      %s177 = sphi 0, %s179
      %s180 = sphi 0, %s177
      %s181 = sphi 0, %s180
      %s197 = sphi 0, %s181
    $region4: #{transformer_layer.1} parent=1 // loop_header_branch
      %18 = sbr.rel (%p16) target = $region8
    $region5: #{transformer_layer.1} parent=1 // loop_body
      %s20 = ssub.s32 %s15, 1
      %s21 = ssub.s32 %s15, 2
      %s22 = sadd.s32 %s15, 1
      %s23 = ssub.s32 %s15, %s22
      %p24 = scmp.eq.s32.totalorder %s23, 0
      %s26 = sadd.s32 %s25, 1
      %s27 = scalar_select %p24, %s25, %s26
      %p30 = pneg %p24
      %p31 = scmp.eq.s32.totalorder %s15, 1
      %p32 = por %p30, %p31
      %p33 = scmp.ne.s32.totalorder %s25, %s28
      %p34 = scmp.eq.s32.totalorder %s15, 0
      %p35 = por %p33, %p34
      %p36 = scmp.ne.s32.totalorder %s25, %s28
      %p37 = scmp.eq.s32.totalorder %s20, 1
      %p38 = por %p36, %p37
      %p39 = scmp.ne.s32.totalorder %s28, %s29
      %p40 = scmp.eq.s32.totalorder %s20, 0
      %p41 = por %p39, %p40
      %p42 = scmp.ne.s32.totalorder %s28, %s29
      %p43 = scmp.eq.s32.totalorder %s21, 1
      %p44 = por %p42, %p43
      %p46 = scmp.ne.s32.totalorder %s29, %s45
      %p47 = scmp.eq.s32.totalorder %s21, 0
      %p48 = por %p46, %p47
      %s50 = sadd.s32 %s49, 1
      %p53 = scmp.eq.s32.totalorder %s15, 1
      %p54 = scmp.ne.s32.totalorder %s49, %s51
      %p55 = scmp.eq.s32.totalorder %s15, 0
      %p56 = por %p54, %p55
      %p57 = scmp.ne.s32.totalorder %s49, %s51
      %p58 = scmp.eq.s32.totalorder %s20, 1
      %p59 = por %p57, %p58
      %p60 = scmp.ne.s32.totalorder %s51, %s52
      %p61 = scmp.eq.s32.totalorder %s20, 0
      %p62 = por %p60, %p61
      %p63 = scmp.ne.s32.totalorder %s51, %s52
      %p64 = scmp.eq.s32.totalorder %s21, 1
      %p65 = por %p63, %p64
      %p67 = scmp.ne.s32.totalorder %s52, %s66
      %p68 = scmp.eq.s32.totalorder %s21, 0
      %p69 = por %p67, %p68
      %s71 = sadd.s32 %s70, 1
      %p74 = scmp.eq.s32.totalorder %s15, 1
      %p75 = scmp.ne.s32.totalorder %s70, %s72
      %p76 = scmp.eq.s32.totalorder %s15, 0
      %p77 = por %p75, %p76
      %p78 = scmp.ne.s32.totalorder %s70, %s72
      %p79 = scmp.eq.s32.totalorder %s20, 1
      %p80 = por %p78, %p79
      %p81 = scmp.ne.s32.totalorder %s72, %s73
      %p82 = scmp.eq.s32.totalorder %s20, 0
      %p83 = por %p81, %p82
      %p84 = scmp.ne.s32.totalorder %s72, %s73
      %p85 = scmp.eq.s32.totalorder %s21, 1
      %p86 = por %p84, %p85
      %p88 = scmp.ne.s32.totalorder %s73, %s87
      %p89 = scmp.eq.s32.totalorder %s21, 0
      %p90 = por %p88, %p89
      %s92 = sadd.s32 %s91, 1
      %p95 = scmp.eq.s32.totalorder %s15, 1
      %p96 = scmp.ne.s32.totalorder %s91, %s93
      %p97 = scmp.eq.s32.totalorder %s15, 0
      %p98 = por %p96, %p97
      %p99 = scmp.ne.s32.totalorder %s91, %s93
      %p100 = scmp.eq.s32.totalorder %s20, 1
      %p101 = por %p99, %p100
      %p102 = scmp.ne.s32.totalorder %s93, %s94
      %p103 = scmp.eq.s32.totalorder %s20, 0
      %p104 = por %p102, %p103
      %p105 = scmp.ne.s32.totalorder %s93, %s94
      %p106 = scmp.eq.s32.totalorder %s21, 1
      %p107 = por %p105, %p106
      %p109 = scmp.ne.s32.totalorder %s94, %s108
      %p110 = scmp.eq.s32.totalorder %s21, 0
      %p111 = por %p109, %p110
      %s113 = sadd.s32 %s112, 1
      %p116 = scmp.eq.s32.totalorder %s15, 1
      %p117 = scmp.ne.s32.totalorder %s112, %s114
      %p118 = scmp.eq.s32.totalorder %s15, 0
      %p119 = por %p117, %p118
      %p120 = scmp.ne.s32.totalorder %s112, %s114
      %p121 = scmp.eq.s32.totalorder %s20, 1
      %p122 = por %p120, %p121
      %p123 = scmp.ne.s32.totalorder %s114, %s115
      %p124 = scmp.eq.s32.totalorder %s20, 0
      %p125 = por %p123, %p124
      %p126 = scmp.ne.s32.totalorder %s114, %s115
      %p127 = scmp.eq.s32.totalorder %s21, 1
      %p128 = por %p126, %p127
      %p130 = scmp.ne.s32.totalorder %s115, %s129
      %p131 = scmp.eq.s32.totalorder %s21, 0
      %p132 = por %p130, %p131
      %s134 = sadd.s32 %s133, 1
      %p137 = scmp.eq.s32.totalorder %s15, 1
      %p138 = scmp.ne.s32.totalorder %s133, %s135
      %p139 = scmp.eq.s32.totalorder %s15, 0
      %p140 = por %p138, %p139
      %p141 = scmp.ne.s32.totalorder %s133, %s135
      %p142 = scmp.eq.s32.totalorder %s20, 1
      %p143 = por %p141, %p142
      %p144 = scmp.ne.s32.totalorder %s135, %s136
      %p145 = scmp.eq.s32.totalorder %s20, 0
      %p146 = por %p144, %p145
      %p147 = scmp.ne.s32.totalorder %s135, %s136
      %p148 = scmp.eq.s32.totalorder %s21, 1
      %p149 = por %p147, %p148
      %p151 = scmp.ne.s32.totalorder %s136, %s150
      %p152 = scmp.eq.s32.totalorder %s21, 0
      %p153 = por %p151, %p152
      %s155 = sadd.s32 %s154, 1
      %p158 = scmp.eq.s32.totalorder %s15, 1
      %p159 = scmp.ne.s32.totalorder %s154, %s156
      %p160 = scmp.eq.s32.totalorder %s15, 0
      %p161 = por %p159, %p160
      %p162 = scmp.ne.s32.totalorder %s154, %s156
      %p163 = scmp.eq.s32.totalorder %s20, 1
      %p164 = por %p162, %p163
      %p165 = scmp.ne.s32.totalorder %s156, %s157
      %p166 = scmp.eq.s32.totalorder %s20, 0
      %p167 = por %p165, %p166
      %p168 = scmp.ne.s32.totalorder %s156, %s157
      %p169 = scmp.eq.s32.totalorder %s21, 1
      %p170 = por %p168, %p169
      %p172 = scmp.ne.s32.totalorder %s157, %s171
      %p173 = scmp.eq.s32.totalorder %s21, 0
      %p174 = por %p172, %p173
      %s175 = ssub.s32 %s15, %s22
      %p176 = scmp.eq.s32.totalorder %s175, 0
      %s178 = sadd.s32 %s177, 1
      %s179 = scalar_select %p176, %s177, %s178
      %p182 = pneg %p176
      %p183 = scmp.eq.s32.totalorder %s15, 1
      %p184 = por %p182, %p183
      %p185 = scmp.ne.s32.totalorder %s177, %s180
      %p186 = scmp.eq.s32.totalorder %s15, 0
      %p187 = por %p185, %p186
      %p188 = scmp.ne.s32.totalorder %s177, %s180
      %p189 = scmp.eq.s32.totalorder %s20, 1
      %p190 = por %p188, %p189
      %p191 = scmp.ne.s32.totalorder %s180, %s181
      %p192 = scmp.eq.s32.totalorder %s20, 0
      %p193 = por %p191, %p192
      %p194 = scmp.ne.s32.totalorder %s180, %s181
      %p195 = scmp.eq.s32.totalorder %s21, 1
      %p196 = por %p194, %p195
      %p198 = scmp.ne.s32.totalorder %s181, %s197
      %p199 = scmp.eq.s32.totalorder %s21, 0
      %p200 = por %p198, %p199
      %p201 = scmp.le.s32.totalorder 1, %s15
      %p202 = scmp.lt.s32.totalorder %s15, 3
      %p203 = pnand %p201, %p202
      %p204 = pneg %p203
      // Predicated region
      $region9: #{transformer_layer.1} parent=5 // pred_check
        _
      $region10: #{transformer_layer.1} parent=5 // pred_check_branch
        %206 = sbr.rel (%p203) target = $region12
      $region11: #{transformer_layer.1} parent=5 // pred_region
        %s207 = ssub.s32 %s15, 1
        // Predicated region
        $region13: #{transformer_layer.1} parent=11 // pred_check
          %p208 = pneg %p62
        $region14: #{transformer_layer.1} parent=11 // pred_check_branch
          %210 = sbr.rel (%p208) target = $region16
        $region15: #{transformer_layer.1} parent=11 // pred_region
          _
        $region16: #{transformer_layer.1} parent=11 // pred_fallthru
          _
        // Predicated region
        $region17: #{transformer_layer.1} parent=11 // pred_check
          %p211 = pneg %p83
        $region18: #{transformer_layer.1} parent=11 // pred_check_branch
          %213 = sbr.rel (%p211) target = $region20
        $region19: #{transformer_layer.1} parent=11 // pred_region
          _
        $region20: #{transformer_layer.1} parent=11 // pred_fallthru
          _
        // Predicated region
        $region21: #{transformer_layer.1} parent=11 // pred_check
          %p214 = pneg %p104
        $region22: #{transformer_layer.1} parent=11 // pred_check_branch
          %216 = sbr.rel (%p214) target = $region24
        $region23: #{transformer_layer.1} parent=11 // pred_region
          _
        $region24: #{transformer_layer.1} parent=11 // pred_fallthru
          _
        // Predicated region
        $region25: #{transformer_layer.1} parent=11 // pred_check
          %p217 = pneg %p125
        $region26: #{transformer_layer.1} parent=11 // pred_check_branch
          %219 = sbr.rel (%p217) target = $region28
        $region27: #{transformer_layer.1} parent=11 // pred_region
          _
        $region28: #{transformer_layer.1} parent=11 // pred_fallthru
          _
        // Predicated region
        $region29: #{transformer_layer.1} parent=11 // pred_check
          %p220 = pneg %p146
        $region30: #{transformer_layer.1} parent=11 // pred_check_branch
          %222 = sbr.rel (%p220) target = $region32
        $region31: #{transformer_layer.1} parent=11 // pred_region
          %s224 = ssub.s32 1024, 1024
          %225 = vsyncadd [#allocation4], %s224
          %s226 = sshll.u32 [#allocation3], 4
          %s227 = int_to_ptr.vmem [resolvable:$true] %s226
          %232 = dma.hbm_to_vmem [thread:$0]  %s5, 1024, %s227, [#allocation4], 64, 64, 4
        $region32: #{transformer_layer.1} parent=11 // pred_fallthru
          _
        // Predicated region
        $region33: #{transformer_layer.1} parent=11 // pred_check
          %p233 = pneg %p167
        $region34: #{transformer_layer.1} parent=11 // pred_check_branch
          %235 = sbr.rel (%p233) target = $region36
        $region35: #{transformer_layer.1} parent=11 // pred_region
          %s237 = ssub.s32 1024, 1024
          %238 = vsyncadd [#allocation6], %s237
          %s239 = sshll.u32 [#allocation5], 4
          %s240 = int_to_ptr.vmem [resolvable:$true] %s239
          %245 = dma.hbm_to_vmem [thread:$0]  %s6, 1024, %s240, [#allocation6], 64, 64, 4
        $region36: #{transformer_layer.1} parent=11 // pred_fallthru
          _
      $region12: #{transformer_layer.1} parent=5 // pred_fallthru
        _
      %p246 = scmp.lt.s32.totalorder %s15, 2
      // Predicated region
      $region37: #{transformer_layer.1} parent=5 // pred_check
        %p247 = pneg %p246
      $region38: #{transformer_layer.1} parent=5 // pred_check_branch
        %249 = sbr.rel (%p247) target = $region40
      $region39: #{transformer_layer.1} parent=5 // pred_region
        // Predicated region
        $region41: #{transformer_layer.1} parent=39 // pred_check
          %p250 = pneg %p35
        $region42: #{transformer_layer.1} parent=39 // pred_check_branch
          %252 = sbr.rel (%p250) target = $region44
        $region43: #{transformer_layer.1} parent=39 // pred_region
          %s253 = sand.u32 %s25, 1
          %s254 = sand.u32 %s25, 1
          %s255 = smul.addr %s254, 64
          %s256 = scalar_lea.vmem [#allocation2], %s255
          %s257 = smul.addr %s15, 8
          %s258 = scalar_lea.vmem %s0, %s257
          // Predicated region
          $region45: #{transformer_layer.1} parent=43 // pred_check
            _
          $region46: #{transformer_layer.1} parent=43 // pred_check_branch
            %260 = sbr.rel (0) target = $region48
          $region47: #{transformer_layer.1} parent=43 // pred_region
            // Predicated region
            $region49: #{transformer_layer.1} parent=47 // pred_check
              _
            $region50: #{transformer_layer.1} parent=47 // pred_check_branch
              %262 = sbr.rel (0) target = $region52
            $region51: #{transformer_layer.1} parent=47 // pred_region
              // Predicated region
              $region64: #{transformer_layer.1} parent=51 // pred_check
                _
              $region65: #{transformer_layer.1} parent=51 // pred_check_branch
                %291 = sbr.rel (0) target = $region67
              $region66: #{transformer_layer.1} parent=51 // pred_region
                loop: start=0, step=1, limit=1
                $region68: #{transformer_layer.1} parent=66 // loop_pre_header
                  _
                $region69: #{transformer_layer.1} parent=66 // loop_header
                  %s293 = sphi 0, %s297
                  %p294 = scmp.ge.s32.totalorder %s293, 1
                  %s298 = sphi %s258, %s258
                  %s299 = sphi %s256, %s256
                $region70: #{transformer_layer.1} parent=66 // loop_header_branch
                  %296 = sbr.rel (%p294) target = $region74
                $region71: #{transformer_layer.1} parent=66 // loop_body
                  %v300 = vld [vmem:[%s298] sm:$0xff]
                  %301 = vst [vmem:[%s299] sm:$0xff] %v300
                  %v302 = vld [vmem:[%s298 + $0x10] sm:$0xff]
                  %303 = vst [vmem:[%s299 + $0x8] sm:$0xff] %v302
                  %v304 = vld [vmem:[%s298 + $0x20] sm:$0xff]
                  %305 = vst [vmem:[%s299 + $0x10] sm:$0xff] %v304
                  %v306 = vld [vmem:[%s298 + $0x30] sm:$0xff]
                  %307 = vst [vmem:[%s299 + $0x18] sm:$0xff] %v306
                  %v308 = vld [vmem:[%s298 + $0x40] sm:$0xff]
                  %309 = vst [vmem:[%s299 + $0x20] sm:$0xff] %v308
                  %v310 = vld [vmem:[%s298 + $0x50] sm:$0xff]
                  %311 = vst [vmem:[%s299 + $0x28] sm:$0xff] %v310
                  %v312 = vld [vmem:[%s298 + $0x60] sm:$0xff]
                  %313 = vst [vmem:[%s299 + $0x30] sm:$0xff] %v312
                  %v314 = vld [vmem:[%s298 + $0x70] sm:$0xff]
                  %315 = vst [vmem:[%s299 + $0x38] sm:$0xff] %v314
                $region72: #{transformer_layer.1} parent=66 // loop_footer
                  %s297 = sadd.s32 1, %s293
                $region73: #{transformer_layer.1} parent=66 // loop_footer_branch
                  %292 = sbr.rel target = $region69
                $region74: #{transformer_layer.1} parent=66 // loop_exit
                  _
              $region67: #{transformer_layer.1} parent=51 // pred_fallthru
                _
              // Predicated region
              $region75: #{transformer_layer.1} parent=51 // pred_check
                _
              $region76: #{transformer_layer.1} parent=51 // pred_check_branch
                %317 = sbr.rel target = $region78
              $region77: #{transformer_layer.1} parent=51 // pred_region
                _
              $region78: #{transformer_layer.1} parent=51 // pred_fallthru
                _
            $region52: #{transformer_layer.1} parent=47 // pred_fallthru
              _
            // Predicated region
            $region53: #{transformer_layer.1} parent=47 // pred_check
              _
            $region54: #{transformer_layer.1} parent=47 // pred_check_branch
              %264 = sbr.rel target = $region56
            $region55: #{transformer_layer.1} parent=47 // pred_region
              loop: start=0, step=1, limit=1
              $region57: #{transformer_layer.1} parent=55 // loop_pre_header
                _
              $region58: #{transformer_layer.1} parent=55 // loop_header
                %s267 = sphi 0, %s271
                %p268 = scmp.ge.s32.totalorder %s267, 1
                %s272 = sphi %s258, %s258
                %s273 = sphi %s256, %s256
              $region59: #{transformer_layer.1} parent=55 // loop_header_branch
                %270 = sbr.rel (%p268) target = $region63
              $region60: #{transformer_layer.1} parent=55 // loop_body
                %v274 = vld [vmem:[%s272] sm:$0xff]
                %275 = vst [vmem:[%s273] sm:$0xff] %v274
                %v276 = vld [vmem:[%s272 + $0x10] sm:$0xff]
                %277 = vst [vmem:[%s273 + $0x8] sm:$0xff] %v276
                %v278 = vld [vmem:[%s272 + $0x20] sm:$0xff]
                %279 = vst [vmem:[%s273 + $0x10] sm:$0xff] %v278
                %v280 = vld [vmem:[%s272 + $0x30] sm:$0xff]
                %281 = vst [vmem:[%s273 + $0x18] sm:$0xff] %v280
                %v282 = vld [vmem:[%s272 + $0x40] sm:$0xff]
                %283 = vst [vmem:[%s273 + $0x20] sm:$0xff] %v282
                %v284 = vld [vmem:[%s272 + $0x50] sm:$0xff]
                %285 = vst [vmem:[%s273 + $0x28] sm:$0xff] %v284
                %v286 = vld [vmem:[%s272 + $0x60] sm:$0xff]
                %287 = vst [vmem:[%s273 + $0x30] sm:$0xff] %v286
                %v288 = vld [vmem:[%s272 + $0x70] sm:$0xff]
                %289 = vst [vmem:[%s273 + $0x38] sm:$0xff] %v288
              $region61: #{transformer_layer.1} parent=55 // loop_footer
                %s271 = sadd.s32 1, %s267
              $region62: #{transformer_layer.1} parent=55 // loop_footer_branch
                %266 = sbr.rel target = $region58
              $region63: #{transformer_layer.1} parent=55 // loop_exit
                _
            $region56: #{transformer_layer.1} parent=47 // pred_fallthru
              _
          $region48: #{transformer_layer.1} parent=43 // pred_fallthru
            _
          %318 = vnop
        $region44: #{transformer_layer.1} parent=39 // pred_fallthru
          _
      $region40: #{transformer_layer.1} parent=5 // pred_fallthru
        _
      %p319 = scmp.le.s32.totalorder 1, %s15
      %p320 = scmp.lt.s32.totalorder %s15, 3
      %p321 = pnand %p319, %p320
      %p322 = pneg %p321
      // Predicated region
      $region79: #{transformer_layer.1} parent=5 // pred_check
        _
      $region80: #{transformer_layer.1} parent=5 // pred_check_branch
        %324 = sbr.rel (%p321) target = $region82
      $region81: #{transformer_layer.1} parent=5 // pred_region
        %s325 = ssub.s32 %s15, 1
        %s326 = sand.u32 %s28, 1
        %s327 = sand.u32 %s28, 1
        %s328 = smul.addr %s327, 64
        %s329 = scalar_lea.vmem [#allocation2], %s328
        // Predicated region
        $region83: #{transformer_layer.1} parent=81 // pred_check
          %p330 = pneg %p41
        $region84: #{transformer_layer.1} parent=81 // pred_check_branch
          %332 = sbr.rel (%p330) target = $region86
        $region85: #{transformer_layer.1} parent=81 // pred_region
          _
        $region86: #{transformer_layer.1} parent=81 // pred_fallthru
          _
        // Predicated region
        $region87: #{transformer_layer.1} parent=81 // pred_check
          %p333 = pneg %p146
        $region88: #{transformer_layer.1} parent=81 // pred_check_branch
          %335 = sbr.rel (%p333) target = $region90
        $region89: #{transformer_layer.1} parent=81 // pred_region
          %336 = dma.done [#allocation4], 1024
        $region90: #{transformer_layer.1} parent=81 // pred_fallthru
          _
        // Predicated region
        $region91: #{transformer_layer.1} parent=81 // pred_check
          %p337 = pneg %p167
        $region92: #{transformer_layer.1} parent=81 // pred_check_branch
          %339 = sbr.rel (%p337) target = $region94
        $region93: #{transformer_layer.1} parent=81 // pred_region
          %340 = dma.done [#allocation6], 1024
        $region94: #{transformer_layer.1} parent=81 // pred_fallthru
          _
        %s341 = sand.u32 %s28, 1
        %s342 = sand.u32 %s28, 1
        %s343 = smul.addr %s342, 64
        %s344 = scalar_lea.vmem [#allocation2], %s343
        %p345 = pneg %p41
        %p346 = pneg %p38
        %p347 = pneg %p62
        %p348 = pneg %p59
        %p349 = pneg %p83
        %p350 = pneg %p80
        %p351 = pneg %p104
        %p352 = pneg %p101
        %p353 = pneg %p125
        %p354 = pneg %p122
        %p355 = pneg %p146
        %p356 = pneg %p143
        %p357 = pneg %p167
        %p358 = pneg %p164
        %p359 = pneg %p193
        %p360 = pneg %p190
        %s361 = sand.u32 %s180, 1
        %s362 = sand.u32 %s180, 1
        %s363 = smul.addr %s362, 64
        %s364 = scalar_lea.vmem [#allocation7], %s363
        %v366 = vld [vmem:[%s329] sm:$0xff]
        %v367 = vld [vmem:[%s329 + $0x8] sm:$0xff]
        %v368 = vld [vmem:[%s329 + $0x10] sm:$0xff]
        %v369 = vld [vmem:[%s329 + $0x18] sm:$0xff]
        %v370 = vld [vmem:[%s329 + $0x20] sm:$0xff]
        %v371 = vld [vmem:[%s329 + $0x28] sm:$0xff]
        %v372 = vld [vmem:[%s329 + $0x30] sm:$0xff]
        %v373 = vld [vmem:[%s329 + $0x38] sm:$0xff]
        %v374 = vpack.c.bf16 %v367, %v366
        %v375 = vpack.c.bf16 %v369, %v368
        %v376 = vpack.c.bf16 %v371, %v370
        %v377 = vpack.c.bf16 %v373, %v372
        %v378 = vld [vmem:[%s1] sm:$0xff]
        %v379 = vld [vmem:[%s1 + $0x8] sm:$0xf]
        %v380 = vld [vmem:[%s1 + $0xc] sm:$0xff]
        %v381 = vld [vmem:[%s1 + $0x14] sm:$0xf]
        %v382 = vld [vmem:[%s1 + $0x18] sm:$0xff]
        %v383 = vld [vmem:[%s1 + $0x20] sm:$0xf]
        %v384 = vld [vmem:[%s1 + $0x24] sm:$0xff]
        %v385 = vld [vmem:[%s1 + $0x2c] sm:$0xf]
        %v386 = vld [vmem:[%s1 + $0x30] sm:$0xff]
        %v387 = vld [vmem:[%s1 + $0x38] sm:$0xf]
        %v388 = vld [vmem:[%s1 + $0x3c] sm:$0xff]
        %v389 = vld [vmem:[%s1 + $0x44] sm:$0xf]
        %v390 = vld [vmem:[%s1 + $0x48] sm:$0xff]
        %v391 = vld [vmem:[%s1 + $0x50] sm:$0xf]
        %v392 = vld [vmem:[%s1 + $0x54] sm:$0xff]
        %v393 = vld [vmem:[%s1 + $0x5c] sm:$0xf]
        %v394 = vld [vmem:[%s1 + $0x60] sm:$0xff]
        %v395 = vld [vmem:[%s1 + $0x68] sm:$0xf]
        %v396 = vld [vmem:[%s1 + $0x6c] sm:$0xff]
        %v397 = vld [vmem:[%s1 + $0x74] sm:$0xf]
        %v398 = vld [vmem:[%s1 + $0x78] sm:$0xff]
        %v399 = vld [vmem:[%s1 + $0x80] sm:$0xf]
        %v400 = vld [vmem:[%s1 + $0x84] sm:$0xff]
        %v401 = vld [vmem:[%s1 + $0x8c] sm:$0xf]
        %v402 = vld [vmem:[%s1 + $0x90] sm:$0xff]
        %v403 = vld [vmem:[%s1 + $0x98] sm:$0xf]
        %v404 = vld [vmem:[%s1 + $0x9c] sm:$0xff]
        %v405 = vld [vmem:[%s1 + $0xa4] sm:$0xf]
        %v406 = vld [vmem:[%s1 + $0xa8] sm:$0xff]
        %v407 = vld [vmem:[%s1 + $0xb0] sm:$0xf]
        %v408 = vld [vmem:[%s1 + $0xb4] sm:$0xff]
        %v409 = vld [vmem:[%s1 + $0xbc] sm:$0xf]
        %v410 = vld [vmem:[%s2] sm:$0x7]
        %v412 = vlaneseq
        %v413 = vshrl.u32 %v412, 7
        %v414 = vsub.s32 0, %v413
        %v415 = vrot.slane %v410, %v414
        %v416 = vlaneseq
        %v417 = vshrl.u32 %v416, 7
        %v418 = vsub.s32 1, %v417
        %v419 = vrot.slane %v410, %v418
        %v420 = vlaneseq
        %v421 = vshrl.u32 %v420, 7
        %v422 = vsub.s32 2, %v421
        %v423 = vrot.slane %v410, %v422
        %v459 = vunpack.c.l.b16 %v378
        %v460 = vunpack.c.h.b16 %v378
        %v461 = vunpack.c.l.b16 %v379
        %v462 = vunpack.c.l.b16 %v380
        %v463 = vunpack.c.h.b16 %v380
        %v464 = vunpack.c.l.b16 %v381
        %v465 = vunpack.c.l.b16 %v382
        %v466 = vunpack.c.h.b16 %v382
        %v467 = vunpack.c.l.b16 %v383
        %v468 = vunpack.c.l.b16 %v384
        %v469 = vunpack.c.h.b16 %v384
        %v470 = vunpack.c.l.b16 %v385
        %v471 = vunpack.c.l.b16 %v386
        %v472 = vunpack.c.h.b16 %v386
        %v473 = vunpack.c.l.b16 %v387
        %v474 = vunpack.c.l.b16 %v388
        %v475 = vunpack.c.h.b16 %v388
        %v476 = vunpack.c.l.b16 %v389
        %v477 = vunpack.c.l.b16 %v390
        %v478 = vunpack.c.h.b16 %v390
        %v479 = vunpack.c.l.b16 %v391
        %v480 = vunpack.c.l.b16 %v392
        %v481 = vunpack.c.h.b16 %v392
        %v482 = vunpack.c.l.b16 %v393
        %v483 = vunpack.c.l.b16 %v394
        %v484 = vunpack.c.h.b16 %v394
        %v485 = vunpack.c.l.b16 %v395
        %v486 = vunpack.c.l.b16 %v396
        %v487 = vunpack.c.h.b16 %v396
        %v488 = vunpack.c.l.b16 %v397
        %v489 = vunpack.c.l.b16 %v398
        %v490 = vunpack.c.h.b16 %v398
        %v491 = vunpack.c.l.b16 %v399
        %v492 = vunpack.c.l.b16 %v400
        %v493 = vunpack.c.h.b16 %v400
        %v494 = vunpack.c.l.b16 %v401
        %v495 = vunpack.c.l.b16 %v402
        %v496 = vunpack.c.h.b16 %v402
        %v497 = vunpack.c.l.b16 %v403
        %v498 = vunpack.c.l.b16 %v404
        %v499 = vunpack.c.h.b16 %v404
        %v500 = vunpack.c.l.b16 %v405
        %v501 = vunpack.c.l.b16 %v406
        %v502 = vunpack.c.h.b16 %v406
        %v503 = vunpack.c.l.b16 %v407
        %v504 = vunpack.c.l.b16 %v408
        %v505 = vunpack.c.h.b16 %v408
        %v506 = vunpack.c.l.b16 %v409
        %v507 = vpack.c.b16 %v462, %v459
        %v508 = vpack.c.b16 %v463, %v460
        %v509 = vpack.c.b16 %v464, %v461
        %v510 = vpack.c.b16 %v468, %v465
        %v511 = vpack.c.b16 %v469, %v466
        %v512 = vpack.c.b16 %v470, %v467
        %v513 = vpack.c.b16 %v474, %v471
        %v514 = vpack.c.b16 %v475, %v472
        %v515 = vpack.c.b16 %v476, %v473
        %v516 = vpack.c.b16 %v480, %v477
        %v517 = vpack.c.b16 %v481, %v478
        %v518 = vpack.c.b16 %v482, %v479
        %v519 = vpack.c.b16 %v486, %v483
        %v520 = vpack.c.b16 %v487, %v484
        %v521 = vpack.c.b16 %v488, %v485
        %v522 = vpack.c.b16 %v492, %v489
        %v523 = vpack.c.b16 %v493, %v490
        %v524 = vpack.c.b16 %v494, %v491
        %v525 = vpack.c.b16 %v498, %v495
        %v526 = vpack.c.b16 %v499, %v496
        %v527 = vpack.c.b16 %v500, %v497
        %v528 = vpack.c.b16 %v504, %v501
        %v529 = vpack.c.b16 %v505, %v502
        %v530 = vpack.c.b16 %v506, %v503
        %555 = vmatprep.subr.bf16.mxu0 %v508
        %556 = vmatpush1.bf16.msra.mxu0 %v507
        %557 = vmatprep.subr.bf16.mxu0 %v511
        %558 = vmatpush1.bf16.msra.mxu0 %v510
        %559 = vmatprep.subr.bf16.mxu0 %v514
        %560 = vmatpush1.bf16.msra.mxu0 %v513
        %561 = vmatprep.subr.bf16.mxu0 %v517
        %562 = vmatpush1.bf16.msra.mxu0 %v516
        %563 = vmatprep.subr.bf16.mxu0 %v520
        %564 = vmatpush1.bf16.msra.mxu0 %v519
        %565 = vmatprep.subr.bf16.mxu0 %v523
        %566 = vmatpush1.bf16.msra.mxu0 %v522
        %567 = vmatprep.subr.bf16.mxu0 %v526
        %568 = vmatpush1.bf16.msra.mxu0 %v525
        %569 = vmatprep.subr.bf16.mxu0 %v529
        %570 = vmatpush1.bf16.msra.mxu0 %v528
        %571 = vmatprep.subr.bf16.mxu0 0
        %572 = vmatpush1.bf16.msra.mxu0 0
        %573 = vmatprep.subr.bf16.mxu0 0
        %574 = vmatpush1.bf16.msra.mxu0 0
        %575 = vmatprep.subr.bf16.mxu0 0
        %576 = vmatpush1.bf16.msra.mxu0 0
        %577 = vmatprep.subr.bf16.mxu0 0
        %578 = vmatpush1.bf16.msra.mxu0 0
        %579 = vmatprep.subr.bf16.mxu0 0
        %580 = vmatpush1.bf16.msra.mxu0 0
        %581 = vmatprep.subr.bf16.mxu0 0
        %582 = vmatpush1.bf16.msra.mxu0 0
        %583 = vmatprep.subr.bf16.mxu0 0
        %584 = vmatpush1.bf16.msra.mxu0 0
        %585 = vmatprep.subr.bf16.mxu0 0
        %586 = vmatpush1.bf16.msra.mxu0 0
        %587 = vmatprep.mubr.bf16.mxu0 0
        %588 = vmatmul.mubr.bf16.gmra.mrb[0].mxu0 %v374
        %v589 = vpop.f32.mrb[0].mxu0
        %v590 = vadd.f32 %v415, %v589
        %v591 = vpop.f32.mrb[0].mxu0
        %v592 = vadd.f32 %v419, %v591
        %v593 = vpop.f32.mrb[0].mxu0
        %v594 = vadd.f32 %v415, %v593
        %v595 = vpop.f32.mrb[0].mxu0
        %v596 = vadd.f32 %v419, %v595
        %597 = vmatprep.mubr.bf16.mxu0 0
        %598 = vmatmul.mubr.bf16.gmra.mrb[0].mxu0 %v375
        %v599 = vpop.f32.mrb[0].mxu0
        %v600 = vadd.f32 %v415, %v599
        %v601 = vpop.f32.mrb[0].mxu0
        %v602 = vadd.f32 %v419, %v601
        %v603 = vpop.f32.mrb[0].mxu0
        %v604 = vadd.f32 %v415, %v603
        %v605 = vpop.f32.mrb[0].mxu0
        %v606 = vadd.f32 %v419, %v605
        %607 = vmatprep.mubr.bf16.mxu0 0
        %608 = vmatmul.mubr.bf16.gmra.mrb[0].mxu0 %v376
        %v609 = vpop.f32.mrb[0].mxu0
        %v610 = vadd.f32 %v415, %v609
        %v611 = vpop.f32.mrb[0].mxu0
        %v612 = vadd.f32 %v419, %v611
        %v613 = vpop.f32.mrb[0].mxu0
        %v614 = vadd.f32 %v415, %v613
        %v615 = vpop.f32.mrb[0].mxu0
        %v616 = vadd.f32 %v419, %v615
        %617 = vmatprep.mubr.bf16.mxu0 0
        %618 = vmatmul.mubr.bf16.gmra.mrb[0].mxu0 %v377
        %v619 = vpop.f32.mrb[0].mxu0
        %v620 = vadd.f32 %v415, %v619
        %v621 = vpop.f32.mrb[0].mxu0
        %v622 = vadd.f32 %v419, %v621
        %v623 = vpop.f32.mrb[0].mxu0
        %v624 = vadd.f32 %v415, %v623
        %v625 = vpop.f32.mrb[0].mxu0
        %v626 = vadd.f32 %v419, %v625
        %627 = vdwg.mxu0
        %628 = vmatprep.subr.bf16.mxu0 0
        %629 = vmatpush1.bf16.msra.mxu0 %v509
        %630 = vmatprep.subr.bf16.mxu0 0
        %631 = vmatpush1.bf16.msra.mxu0 %v512
        %632 = vmatprep.subr.bf16.mxu0 0
        %633 = vmatpush1.bf16.msra.mxu0 %v515
        %634 = vmatprep.subr.bf16.mxu0 0
        %635 = vmatpush1.bf16.msra.mxu0 %v518
        %636 = vmatprep.subr.bf16.mxu0 0
        %637 = vmatpush1.bf16.msra.mxu0 %v521
        %638 = vmatprep.subr.bf16.mxu0 0
        %639 = vmatpush1.bf16.msra.mxu0 %v524
        %640 = vmatprep.subr.bf16.mxu0 0
        %641 = vmatpush1.bf16.msra.mxu0 %v527
        %642 = vmatprep.subr.bf16.mxu0 0
        %643 = vmatpush1.bf16.msra.mxu0 %v530
        %644 = vmatprep.subr.bf16.mxu0 0
        %645 = vmatpush1.bf16.msra.mxu0 0
        %646 = vmatprep.subr.bf16.mxu0 0
        %647 = vmatpush1.bf16.msra.mxu0 0
        %648 = vmatprep.subr.bf16.mxu0 0
        %649 = vmatpush1.bf16.msra.mxu0 0
        %650 = vmatprep.subr.bf16.mxu0 0
        %651 = vmatpush1.bf16.msra.mxu0 0
        %652 = vmatprep.subr.bf16.mxu0 0
        %653 = vmatpush1.bf16.msra.mxu0 0
        %654 = vmatprep.subr.bf16.mxu0 0
        %655 = vmatpush1.bf16.msra.mxu0 0
        %656 = vmatprep.subr.bf16.mxu0 0
        %657 = vmatpush1.bf16.msra.mxu0 0
        %658 = vmatprep.subr.bf16.mxu0 0
        %659 = vmatpush1.bf16.msra.mxu0 0
        %660 = vmatprep.mubr.bf16.mxu0 0
        %661 = vmatmul.mubr.bf16.gmra.mrb[0].mxu0 %v374
        %v662 = vpop.f32.mrb[0].mxu0
        %v663 = vadd.f32 %v423, %v662
        %v664 = vpop.f32.mrb[0].mxu0
        %v665 = vpop.f32.mrb[0].mxu0
        %v666 = vadd.f32 %v423, %v665
        %v667 = vpop.f32.mrb[0].mxu0
        %668 = vmatprep.mubr.bf16.mxu0 0
        %669 = vmatmul.mubr.bf16.gmra.mrb[0].mxu0 %v375
        %v670 = vpop.f32.mrb[0].mxu0
        %v671 = vadd.f32 %v423, %v670
        %v672 = vpop.f32.mrb[0].mxu0
        %v673 = vpop.f32.mrb[0].mxu0
        %v674 = vadd.f32 %v423, %v673
        %v675 = vpop.f32.mrb[0].mxu0
        %676 = vmatprep.mubr.bf16.mxu0 0
        %677 = vmatmul.mubr.bf16.gmra.mrb[0].mxu0 %v376
        %v678 = vpop.f32.mrb[0].mxu0
        %v679 = vadd.f32 %v423, %v678
        %v680 = vpop.f32.mrb[0].mxu0
        %v681 = vpop.f32.mrb[0].mxu0
        %v682 = vadd.f32 %v423, %v681
        %v683 = vpop.f32.mrb[0].mxu0
        %684 = vmatprep.mubr.bf16.mxu0 0
        %685 = vmatmul.mubr.bf16.gmra.mrb[0].mxu0 %v377
        %v686 = vpop.f32.mrb[0].mxu0
        %v687 = vadd.f32 %v423, %v686
        %v688 = vpop.f32.mrb[0].mxu0
        %v689 = vpop.f32.mrb[0].mxu0
        %v690 = vadd.f32 %v423, %v689
        %v691 = vpop.f32.mrb[0].mxu0
        %692 = vdwg.mxu0
        %v693 = vpack.c.bf16 %v594, %v590
        %v694 = vpack.c.bf16 %v596, %v592
        %v695 = vpack.c.bf16 %v666, %v663
        %v696 = vpack.c.bf16 %v604, %v600
        %v697 = vpack.c.bf16 %v606, %v602
        %v698 = vpack.c.bf16 %v674, %v671
        %v699 = vpack.c.bf16 %v614, %v610
        %v700 = vpack.c.bf16 %v616, %v612
        %v701 = vpack.c.bf16 %v682, %v679
        %v702 = vpack.c.bf16 %v624, %v620
        %v703 = vpack.c.bf16 %v626, %v622
        %v704 = vpack.c.bf16 %v690, %v687
        %vm705 = vcmask 261120
        %v707 = vsel %vm705, %v693, 0
        %v710 = vsel %vm705, %v696, 0
        %v713 = vsel %vm705, %v699, 0
        %v716 = vsel %vm705, %v702, 0
        %v719 = vsel %vm705, %v694, 0
        %v722 = vsel %vm705, %v697, 0
        %v725 = vsel %vm705, %v700, 0
        %v728 = vsel %vm705, %v703, 0
        %730 = vmatprep.subr.bf16.mxu0 0
        %731 = vmatpush1.bf16.xpose.msra.mxu0 %v719
        %732 = vmatprep.subr.bf16.mxu0 0
        %733 = vmatpush1.bf16.xpose.msra.mxu0 %v722
        %734 = vmatprep.subr.bf16.mxu0 0
        %735 = vmatpush1.bf16.xpose.msra.mxu0 %v725
        %736 = vmatprep.subr.bf16.mxu0 0
        %737 = vmatpush1.bf16.xpose.msra.mxu0 %v728
        %738 = vmatprep.subr.bf16.mxu0 0
        %739 = vmatpush1.bf16.xpose.msra.mxu0 0
        %740 = vmatprep.subr.bf16.mxu0 0
        %741 = vmatpush1.bf16.xpose.msra.mxu0 0
        %742 = vmatprep.subr.bf16.mxu0 0
        %743 = vmatpush1.bf16.xpose.msra.mxu0 0
        %744 = vmatprep.subr.bf16.mxu0 0
        %745 = vmatpush1.bf16.xpose.msra.mxu0 0
        %746 = vmatprep.subr.bf16.mxu0 0
        %747 = vmatpush1.bf16.xpose.msra.mxu0 0
        %748 = vmatprep.subr.bf16.mxu0 0
        %749 = vmatpush1.bf16.xpose.msra.mxu0 0
        %750 = vmatprep.subr.bf16.mxu0 0
        %751 = vmatpush1.bf16.xpose.msra.mxu0 0
        %752 = vmatprep.subr.bf16.mxu0 0
        %753 = vmatpush1.bf16.xpose.msra.mxu0 0
        %754 = vmatprep.subr.bf16.mxu0 0
        %755 = vmatpush1.bf16.xpose.msra.mxu0 0
        %756 = vmatprep.subr.bf16.mxu0 0
        %757 = vmatpush1.bf16.xpose.msra.mxu0 0
        %758 = vmatprep.subr.bf16.mxu0 0
        %759 = vmatpush1.bf16.xpose.msra.mxu0 0
        %760 = vmatprep.subr.bf16.mxu0 0
        %761 = vmatpush1.bf16.xpose.msra.mxu0 0
        %762 = vmatprep.mubr.bf16.mxu0 0
        %763 = vmatmul.mubr.bf16.gmra.mrb[0].mxu0 %v707
        %v764 = vpop.f32.mrb[0].mxu0
        %v765 = vadd.f32 0.0, %v764
        %v766 = vpop.f32.mrb[0].mxu0
        %v767 = vpop.f32.mrb[0].mxu0
        %v768 = vadd.f32 0.0, %v767
        %v769 = vpop.f32.mrb[0].mxu0
        %770 = vmatprep.mubr.bf16.mxu0 0
        %771 = vmatmul.mubr.bf16.gmra.mrb[0].mxu0 %v710
        %v772 = vpop.f32.mrb[0].mxu0
        %v773 = vadd.f32 0.0, %v772
        %v774 = vpop.f32.mrb[0].mxu0
        %v775 = vpop.f32.mrb[0].mxu0
        %v776 = vadd.f32 0.0, %v775
        %v777 = vpop.f32.mrb[0].mxu0
        %778 = vmatprep.mubr.bf16.mxu0 0
        %779 = vmatmul.mubr.bf16.gmra.mrb[0].mxu0 %v713
        %v780 = vpop.f32.mrb[0].mxu0
        %v781 = vadd.f32 0.0, %v780
        %v782 = vpop.f32.mrb[0].mxu0
        %v783 = vpop.f32.mrb[0].mxu0
        %v784 = vadd.f32 0.0, %v783
        %v785 = vpop.f32.mrb[0].mxu0
        %786 = vmatprep.mubr.bf16.mxu0 0
        %787 = vmatmul.mubr.bf16.gmra.mrb[0].mxu0 %v716
        %v788 = vpop.f32.mrb[0].mxu0
        %v789 = vadd.f32 0.0, %v788
        %v790 = vpop.f32.mrb[0].mxu0
        %v791 = vpop.f32.mrb[0].mxu0
        %v792 = vadd.f32 0.0, %v791
        %v793 = vpop.f32.mrb[0].mxu0
        %794 = vdwg.mxu0
        %v795 = vmul.f32 %v765, 0.17677669
        %v796 = vmul.f32 %v768, 0.17677669
        %v797 = vmul.f32 %v773, 0.17677669
        %v798 = vmul.f32 %v776, 0.17677669
        %v799 = vmul.f32 %v781, 0.17677669
        %v800 = vmul.f32 %v784, 0.17677669
        %v801 = vmul.f32 %v789, 0.17677669
        %v802 = vmul.f32 %v792, 0.17677669
        %vm803 = vcmask 523264
        %v804 = vsel %vm803, %v795, -inf
        %805 = vmax.xlane.f32.xlu0 %v804
        %v806 = vpop.xlane.xlu0 %805
        %v807 = vsel %vm803, %v796, -inf
        %808 = vmax.xlane.f32.xlu0 %v807
        %v809 = vpop.xlane.xlu0 %808
        %v810 = vsel %vm803, %v797, -inf
        %811 = vmax.xlane.f32.xlu0 %v810
        %v812 = vpop.xlane.xlu0 %811
        %v813 = vsel %vm803, %v798, -inf
        %814 = vmax.xlane.f32.xlu0 %v813
        %v815 = vpop.xlane.xlu0 %814
        %v816 = vsel %vm803, %v799, -inf
        %817 = vmax.xlane.f32.xlu0 %v816
        %v818 = vpop.xlane.xlu0 %817
        %v819 = vsel %vm803, %v800, -inf
        %820 = vmax.xlane.f32.xlu0 %v819
        %v821 = vpop.xlane.xlu0 %820
        %v822 = vsel %vm803, %v801, -inf
        %823 = vmax.xlane.f32.xlu0 %v822
        %v824 = vpop.xlane.xlu0 %823
        %v825 = vsel %vm803, %v802, -inf
        %826 = vmax.xlane.f32.xlu0 %v825
        %v827 = vpop.xlane.xlu0 %826
        %v828 = vsub.f32 %v795, %v806
        %v829 = vsub.f32 %v796, %v809
        %v830 = vsub.f32 %v797, %v812
        %v831 = vsub.f32 %v798, %v815
        %v832 = vsub.f32 %v799, %v818
        %v833 = vsub.f32 %v800, %v821
        %v834 = vsub.f32 %v801, %v824
        %v835 = vsub.f32 %v802, %v827
        %v836 = vmul.f32 %v828, 1.442695
        %v837 = vpow.pop %v836
        %v838 = vmul.f32 %v829, 1.442695
        %v839 = vpow.pop %v838
        %v840 = vmul.f32 %v830, 1.442695
        %v841 = vpow.pop %v840
        %v842 = vmul.f32 %v831, 1.442695
        %v843 = vpow.pop %v842
        %v844 = vmul.f32 %v832, 1.442695
        %v845 = vpow.pop %v844
        %v846 = vmul.f32 %v833, 1.442695
        %v847 = vpow.pop %v846
        %v848 = vmul.f32 %v834, 1.442695
        %v849 = vpow.pop %v848
        %v850 = vmul.f32 %v835, 1.442695
        %v851 = vpow.pop %v850
        %v852 = vsel %vm803, %v837, 0.0
        %853 = vadd.xlane.f32.xlu0 %v852
        %v854 = vpop.xlane.xlu0 %853
        %v855 = vsel %vm803, %v839, 0.0
        %856 = vadd.xlane.f32.xlu0 %v855
        %v857 = vpop.xlane.xlu0 %856
        %v858 = vsel %vm803, %v841, 0.0
        %859 = vadd.xlane.f32.xlu0 %v858
        %v860 = vpop.xlane.xlu0 %859
        %v861 = vsel %vm803, %v843, 0.0
        %862 = vadd.xlane.f32.xlu0 %v861
        %v863 = vpop.xlane.xlu0 %862
        %v864 = vsel %vm803, %v845, 0.0
        %865 = vadd.xlane.f32.xlu0 %v864
        %v866 = vpop.xlane.xlu0 %865
        %v867 = vsel %vm803, %v847, 0.0
        %868 = vadd.xlane.f32.xlu0 %v867
        %v869 = vpop.xlane.xlu0 %868
        %v870 = vsel %vm803, %v849, 0.0
        %871 = vadd.xlane.f32.xlu0 %v870
        %v872 = vpop.xlane.xlu0 %871
        %v873 = vsel %vm803, %v851, 0.0
        %874 = vadd.xlane.f32.xlu0 %v873
        %v875 = vpop.xlane.xlu0 %874
        %v876 = vrcp.pop %v854
        %v877 = vrcp.pop %v857
        %v878 = vrcp.pop %v860
        %v879 = vrcp.pop %v863
        %v880 = vrcp.pop %v866
        %v881 = vrcp.pop %v869
        %v882 = vrcp.pop %v872
        %v883 = vrcp.pop %v875
        %v884 = vmul.f32 %v837, %v876
        %v885 = vmul.f32 %v839, %v877
        %v886 = vmul.f32 %v841, %v878
        %v887 = vmul.f32 %v843, %v879
        %v888 = vmul.f32 %v845, %v880
        %v889 = vmul.f32 %v847, %v881
        %v890 = vmul.f32 %v849, %v882
        %v891 = vmul.f32 %v851, %v883
        %v892 = vpack.c.bf16 %v885, %v884
        %v893 = vpack.c.bf16 %v887, %v886
        %v894 = vpack.c.bf16 %v889, %v888
        %v895 = vpack.c.bf16 %v891, %v890
        %v897 = vsel %vm803, %v892, 0
        %v900 = vsel %vm803, %v893, 0
        %v903 = vsel %vm803, %v894, 0
        %v906 = vsel %vm803, %v895, 0
        %908 = vmatprep.subr.bf16.mxu0 0
        %909 = vmatpush1.bf16.msra.mxu0 %v695
        %910 = vmatprep.subr.bf16.mxu0 0
        %911 = vmatpush1.bf16.msra.mxu0 %v698
        %912 = vmatprep.subr.bf16.mxu0 0
        %913 = vmatpush1.bf16.msra.mxu0 %v701
        %914 = vmatprep.subr.bf16.mxu0 0
        %915 = vmatpush1.bf16.msra.mxu0 %v704
        %916 = vmatprep.subr.bf16.mxu0 0
        %917 = vmatpush1.bf16.msra.mxu0 0
        %918 = vmatprep.subr.bf16.mxu0 0
        %919 = vmatpush1.bf16.msra.mxu0 0
        %920 = vmatprep.subr.bf16.mxu0 0
        %921 = vmatpush1.bf16.msra.mxu0 0
        %922 = vmatprep.subr.bf16.mxu0 0
        %923 = vmatpush1.bf16.msra.mxu0 0
        %924 = vmatprep.subr.bf16.mxu0 0
        %925 = vmatpush1.bf16.msra.mxu0 0
        %926 = vmatprep.subr.bf16.mxu0 0
        %927 = vmatpush1.bf16.msra.mxu0 0
        %928 = vmatprep.subr.bf16.mxu0 0
        %929 = vmatpush1.bf16.msra.mxu0 0
        %930 = vmatprep.subr.bf16.mxu0 0
        %931 = vmatpush1.bf16.msra.mxu0 0
        %932 = vmatprep.subr.bf16.mxu0 0
        %933 = vmatpush1.bf16.msra.mxu0 0
        %934 = vmatprep.subr.bf16.mxu0 0
        %935 = vmatpush1.bf16.msra.mxu0 0
        %936 = vmatprep.subr.bf16.mxu0 0
        %937 = vmatpush1.bf16.msra.mxu0 0
        %938 = vmatprep.subr.bf16.mxu0 0
        %939 = vmatpush1.bf16.msra.mxu0 0
        %940 = vmatprep.mubr.bf16.mxu0 0
        %941 = vmatmul.mubr.bf16.gmra.mrb[0].mxu0 %v897
        %v942 = vpop.f32.mrb[0].mxu0
        %v943 = vadd.f32 0.0, %v942
        %v944 = vpop.f32.mrb[0].mxu0
        %v945 = vpop.f32.mrb[0].mxu0
        %v946 = vadd.f32 0.0, %v945
        %v947 = vpop.f32.mrb[0].mxu0
        %948 = vmatprep.mubr.bf16.mxu0 0
        %949 = vmatmul.mubr.bf16.gmra.mrb[0].mxu0 %v900
        %v950 = vpop.f32.mrb[0].mxu0
        %v951 = vadd.f32 0.0, %v950
        %v952 = vpop.f32.mrb[0].mxu0
        %v953 = vpop.f32.mrb[0].mxu0
        %v954 = vadd.f32 0.0, %v953
        %v955 = vpop.f32.mrb[0].mxu0
        %956 = vmatprep.mubr.bf16.mxu0 0
        %957 = vmatmul.mubr.bf16.gmra.mrb[0].mxu0 %v903
        %v958 = vpop.f32.mrb[0].mxu0
        %v959 = vadd.f32 0.0, %v958
        %v960 = vpop.f32.mrb[0].mxu0
        %v961 = vpop.f32.mrb[0].mxu0
        %v962 = vadd.f32 0.0, %v961
        %v963 = vpop.f32.mrb[0].mxu0
        %964 = vmatprep.mubr.bf16.mxu0 0
        %965 = vmatmul.mubr.bf16.gmra.mrb[0].mxu0 %v906
        %v966 = vpop.f32.mrb[0].mxu0
        %v967 = vadd.f32 0.0, %v966
        %v968 = vpop.f32.mrb[0].mxu0
        %v969 = vpop.f32.mrb[0].mxu0
        %v970 = vadd.f32 0.0, %v969
        %v971 = vpop.f32.mrb[0].mxu0
        %972 = vdwg.mxu0
        %977 = vrot.lane.b32.xlu0 %v693, 96
        %v978 = vpop.permute.xlu0 %977
        %979 = vrot.lane.b32.xlu0 %v696, 96
        %v980 = vpop.permute.xlu0 %979
        %981 = vrot.lane.b32.xlu0 %v699, 96
        %v982 = vpop.permute.xlu0 %981
        %983 = vrot.lane.b32.xlu0 %v702, 96
        %v984 = vpop.permute.xlu0 %983
        %989 = vrot.lane.b32.xlu0 %v694, 96
        %v990 = vpop.permute.xlu0 %989
        %991 = vrot.lane.b32.xlu0 %v697, 96
        %v992 = vpop.permute.xlu0 %991
        %993 = vrot.lane.b32.xlu0 %v700, 96
        %v994 = vpop.permute.xlu0 %993
        %995 = vrot.lane.b32.xlu0 %v703, 96
        %v996 = vpop.permute.xlu0 %995
        %v998 = vsel %vm705, %v978, 0
        %v1001 = vsel %vm705, %v980, 0
        %v1004 = vsel %vm705, %v982, 0
        %v1007 = vsel %vm705, %v984, 0
        %v1010 = vsel %vm705, %v990, 0
        %v1013 = vsel %vm705, %v992, 0
        %v1016 = vsel %vm705, %v994, 0
        %v1019 = vsel %vm705, %v996, 0
        %1021 = vmatprep.subr.bf16.mxu0 0
        %1022 = vmatpush1.bf16.xpose.msra.mxu0 %v1010
        %1023 = vmatprep.subr.bf16.mxu0 0
        %1024 = vmatpush1.bf16.xpose.msra.mxu0 %v1013
        %1025 = vmatprep.subr.bf16.mxu0 0
        %1026 = vmatpush1.bf16.xpose.msra.mxu0 %v1016
        %1027 = vmatprep.subr.bf16.mxu0 0
        %1028 = vmatpush1.bf16.xpose.msra.mxu0 %v1019
        %1029 = vmatprep.subr.bf16.mxu0 0
        %1030 = vmatpush1.bf16.xpose.msra.mxu0 0
        %1031 = vmatprep.subr.bf16.mxu0 0
        %1032 = vmatpush1.bf16.xpose.msra.mxu0 0
        %1033 = vmatprep.subr.bf16.mxu0 0
        %1034 = vmatpush1.bf16.xpose.msra.mxu0 0
        %1035 = vmatprep.subr.bf16.mxu0 0
        %1036 = vmatpush1.bf16.xpose.msra.mxu0 0
        %1037 = vmatprep.subr.bf16.mxu0 0
        %1038 = vmatpush1.bf16.xpose.msra.mxu0 0
        %1039 = vmatprep.subr.bf16.mxu0 0
        %1040 = vmatpush1.bf16.xpose.msra.mxu0 0
        %1041 = vmatprep.subr.bf16.mxu0 0
        %1042 = vmatpush1.bf16.xpose.msra.mxu0 0
        %1043 = vmatprep.subr.bf16.mxu0 0
        %1044 = vmatpush1.bf16.xpose.msra.mxu0 0
        %1045 = vmatprep.subr.bf16.mxu0 0
        %1046 = vmatpush1.bf16.xpose.msra.mxu0 0
        %1047 = vmatprep.subr.bf16.mxu0 0
        %1048 = vmatpush1.bf16.xpose.msra.mxu0 0
        %1049 = vmatprep.subr.bf16.mxu0 0
        %1050 = vmatpush1.bf16.xpose.msra.mxu0 0
        %1051 = vmatprep.subr.bf16.mxu0 0
        %1052 = vmatpush1.bf16.xpose.msra.mxu0 0
        %1053 = vmatprep.mubr.bf16.mxu0 0
        %1054 = vmatmul.mubr.bf16.gmra.mrb[0].mxu0 %v998
        %v1055 = vpop.f32.mrb[0].mxu0
        %v1056 = vadd.f32 0.0, %v1055
        %v1057 = vpop.f32.mrb[0].mxu0
        %v1058 = vpop.f32.mrb[0].mxu0
        %v1059 = vadd.f32 0.0, %v1058
        %v1060 = vpop.f32.mrb[0].mxu0
        %1061 = vmatprep.mubr.bf16.mxu0 0
        %1062 = vmatmul.mubr.bf16.gmra.mrb[0].mxu0 %v1001
        %v1063 = vpop.f32.mrb[0].mxu0
        %v1064 = vadd.f32 0.0, %v1063
        %v1065 = vpop.f32.mrb[0].mxu0
        %v1066 = vpop.f32.mrb[0].mxu0
        %v1067 = vadd.f32 0.0, %v1066
        %v1068 = vpop.f32.mrb[0].mxu0
        %1069 = vmatprep.mubr.bf16.mxu0 0
        %1070 = vmatmul.mubr.bf16.gmra.mrb[0].mxu0 %v1004
        %v1071 = vpop.f32.mrb[0].mxu0
        %v1072 = vadd.f32 0.0, %v1071
        %v1073 = vpop.f32.mrb[0].mxu0
        %v1074 = vpop.f32.mrb[0].mxu0
        %v1075 = vadd.f32 0.0, %v1074
        %v1076 = vpop.f32.mrb[0].mxu0
        %1077 = vmatprep.mubr.bf16.mxu0 0
        %1078 = vmatmul.mubr.bf16.gmra.mrb[0].mxu0 %v1007
        %v1079 = vpop.f32.mrb[0].mxu0
        %v1080 = vadd.f32 0.0, %v1079
        %v1081 = vpop.f32.mrb[0].mxu0
        %v1082 = vpop.f32.mrb[0].mxu0
        %v1083 = vadd.f32 0.0, %v1082
        %v1084 = vpop.f32.mrb[0].mxu0
        %1085 = vdwg.mxu0
        %v1086 = vmul.f32 %v1056, 0.17677669
        %v1087 = vmul.f32 %v1059, 0.17677669
        %v1088 = vmul.f32 %v1064, 0.17677669
        %v1089 = vmul.f32 %v1067, 0.17677669
        %v1090 = vmul.f32 %v1072, 0.17677669
        %v1091 = vmul.f32 %v1075, 0.17677669
        %v1092 = vmul.f32 %v1080, 0.17677669
        %v1093 = vmul.f32 %v1083, 0.17677669
        %v1094 = vsel %vm803, %v1086, -inf
        %1095 = vmax.xlane.f32.xlu0 %v1094
        %v1096 = vpop.xlane.xlu0 %1095
        %v1097 = vsel %vm803, %v1087, -inf
        %1098 = vmax.xlane.f32.xlu0 %v1097
        %v1099 = vpop.xlane.xlu0 %1098
        %v1100 = vsel %vm803, %v1088, -inf
        %1101 = vmax.xlane.f32.xlu0 %v1100
        %v1102 = vpop.xlane.xlu0 %1101
        %v1103 = vsel %vm803, %v1089, -inf
        %1104 = vmax.xlane.f32.xlu0 %v1103
        %v1105 = vpop.xlane.xlu0 %1104
        %v1106 = vsel %vm803, %v1090, -inf
        %1107 = vmax.xlane.f32.xlu0 %v1106
        %v1108 = vpop.xlane.xlu0 %1107
        %v1109 = vsel %vm803, %v1091, -inf
        %1110 = vmax.xlane.f32.xlu0 %v1109
        %v1111 = vpop.xlane.xlu0 %1110
        %v1112 = vsel %vm803, %v1092, -inf
        %1113 = vmax.xlane.f32.xlu0 %v1112
        %v1114 = vpop.xlane.xlu0 %1113
        %v1115 = vsel %vm803, %v1093, -inf
        %1116 = vmax.xlane.f32.xlu0 %v1115
        %v1117 = vpop.xlane.xlu0 %1116
        %v1118 = vsub.f32 %v1086, %v1096
        %v1119 = vsub.f32 %v1087, %v1099
        %v1120 = vsub.f32 %v1088, %v1102
        %v1121 = vsub.f32 %v1089, %v1105
        %v1122 = vsub.f32 %v1090, %v1108
        %v1123 = vsub.f32 %v1091, %v1111
        %v1124 = vsub.f32 %v1092, %v1114
        %v1125 = vsub.f32 %v1093, %v1117
        %v1126 = vmul.f32 %v1118, 1.442695
        %v1127 = vpow.pop %v1126
        %v1128 = vmul.f32 %v1119, 1.442695
        %v1129 = vpow.pop %v1128
        %v1130 = vmul.f32 %v1120, 1.442695
        %v1131 = vpow.pop %v1130
        %v1132 = vmul.f32 %v1121, 1.442695
        %v1133 = vpow.pop %v1132
        %v1134 = vmul.f32 %v1122, 1.442695
        %v1135 = vpow.pop %v1134
        %v1136 = vmul.f32 %v1123, 1.442695
        %v1137 = vpow.pop %v1136
        %v1138 = vmul.f32 %v1124, 1.442695
        %v1139 = vpow.pop %v1138
        %v1140 = vmul.f32 %v1125, 1.442695
        %v1141 = vpow.pop %v1140
        %v1142 = vsel %vm803, %v1127, 0.0
        %1143 = vadd.xlane.f32.xlu0 %v1142
        %v1144 = vpop.xlane.xlu0 %1143
        %v1145 = vsel %vm803, %v1129, 0.0
        %1146 = vadd.xlane.f32.xlu0 %v1145
        %v1147 = vpop.xlane.xlu0 %1146
        %v1148 = vsel %vm803, %v1131, 0.0
        %1149 = vadd.xlane.f32.xlu0 %v1148
        %v1150 = vpop.xlane.xlu0 %1149
        %v1151 = vsel %vm803, %v1133, 0.0
        %1152 = vadd.xlane.f32.xlu0 %v1151
        %v1153 = vpop.xlane.xlu0 %1152
        %v1154 = vsel %vm803, %v1135, 0.0
        %1155 = vadd.xlane.f32.xlu0 %v1154
        %v1156 = vpop.xlane.xlu0 %1155
        %v1157 = vsel %vm803, %v1137, 0.0
        %1158 = vadd.xlane.f32.xlu0 %v1157
        %v1159 = vpop.xlane.xlu0 %1158
        %v1160 = vsel %vm803, %v1139, 0.0
        %1161 = vadd.xlane.f32.xlu0 %v1160
        %v1162 = vpop.xlane.xlu0 %1161
        %v1163 = vsel %vm803, %v1141, 0.0
        %1164 = vadd.xlane.f32.xlu0 %v1163
        %v1165 = vpop.xlane.xlu0 %1164
        %v1166 = vrcp.pop %v1144
        %v1167 = vrcp.pop %v1147
        %v1168 = vrcp.pop %v1150
        %v1169 = vrcp.pop %v1153
        %v1170 = vrcp.pop %v1156
        %v1171 = vrcp.pop %v1159
        %v1172 = vrcp.pop %v1162
        %v1173 = vrcp.pop %v1165
        %v1174 = vmul.f32 %v1127, %v1166
        %v1175 = vmul.f32 %v1129, %v1167
        %v1176 = vmul.f32 %v1131, %v1168
        %v1177 = vmul.f32 %v1133, %v1169
        %v1178 = vmul.f32 %v1135, %v1170
        %v1179 = vmul.f32 %v1137, %v1171
        %v1180 = vmul.f32 %v1139, %v1172
        %v1181 = vmul.f32 %v1141, %v1173
        %v1182 = vpack.c.bf16 %v1175, %v1174
        %v1183 = vpack.c.bf16 %v1177, %v1176
        %v1184 = vpack.c.bf16 %v1179, %v1178
        %v1185 = vpack.c.bf16 %v1181, %v1180
        %1190 = vrot.lane.b32.xlu0 %v695, 96
        %v1191 = vpop.permute.xlu0 %1190
        %1192 = vrot.lane.b32.xlu0 %v698, 96
        %v1193 = vpop.permute.xlu0 %1192
        %1194 = vrot.lane.b32.xlu0 %v701, 96
        %v1195 = vpop.permute.xlu0 %1194
        %1196 = vrot.lane.b32.xlu0 %v704, 96
        %v1197 = vpop.permute.xlu0 %1196
        %v1203 = vsel %vm803, %v1182, 0
        %v1206 = vsel %vm803, %v1183, 0
        %v1209 = vsel %vm803, %v1184, 0
        %v1212 = vsel %vm803, %v1185, 0
        %1214 = vmatprep.subr.bf16.mxu0 0
        %1215 = vmatpush1.bf16.msra.mxu0 %v1191
        %1216 = vmatprep.subr.bf16.mxu0 0
        %1217 = vmatpush1.bf16.msra.mxu0 %v1193
        %1218 = vmatprep.subr.bf16.mxu0 0
        %1219 = vmatpush1.bf16.msra.mxu0 %v1195
        %1220 = vmatprep.subr.bf16.mxu0 0
        %1221 = vmatpush1.bf16.msra.mxu0 %v1197
        %1222 = vmatprep.subr.bf16.mxu0 0
        %1223 = vmatpush1.bf16.msra.mxu0 0
        %1224 = vmatprep.subr.bf16.mxu0 0
        %1225 = vmatpush1.bf16.msra.mxu0 0
        %1226 = vmatprep.subr.bf16.mxu0 0
        %1227 = vmatpush1.bf16.msra.mxu0 0
        %1228 = vmatprep.subr.bf16.mxu0 0
        %1229 = vmatpush1.bf16.msra.mxu0 0
        %1230 = vmatprep.subr.bf16.mxu0 0
        %1231 = vmatpush1.bf16.msra.mxu0 0
        %1232 = vmatprep.subr.bf16.mxu0 0
        %1233 = vmatpush1.bf16.msra.mxu0 0
        %1234 = vmatprep.subr.bf16.mxu0 0
        %1235 = vmatpush1.bf16.msra.mxu0 0
        %1236 = vmatprep.subr.bf16.mxu0 0
        %1237 = vmatpush1.bf16.msra.mxu0 0
        %1238 = vmatprep.subr.bf16.mxu0 0
        %1239 = vmatpush1.bf16.msra.mxu0 0
        %1240 = vmatprep.subr.bf16.mxu0 0
        %1241 = vmatpush1.bf16.msra.mxu0 0
        %1242 = vmatprep.subr.bf16.mxu0 0
        %1243 = vmatpush1.bf16.msra.mxu0 0
        %1244 = vmatprep.subr.bf16.mxu0 0
        %1245 = vmatpush1.bf16.msra.mxu0 0
        %1246 = vmatprep.mubr.bf16.mxu0 0
        %1247 = vmatmul.mubr.bf16.gmra.mrb[0].mxu0 %v1203
        %v1248 = vpop.f32.mrb[0].mxu0
        %v1249 = vadd.f32 0.0, %v1248
        %v1250 = vpop.f32.mrb[0].mxu0
        %v1251 = vpop.f32.mrb[0].mxu0
        %v1252 = vadd.f32 0.0, %v1251
        %v1253 = vpop.f32.mrb[0].mxu0
        %1254 = vmatprep.mubr.bf16.mxu0 0
        %1255 = vmatmul.mubr.bf16.gmra.mrb[0].mxu0 %v1206
        %v1256 = vpop.f32.mrb[0].mxu0
        %v1257 = vadd.f32 0.0, %v1256
        %v1258 = vpop.f32.mrb[0].mxu0
        %v1259 = vpop.f32.mrb[0].mxu0
        %v1260 = vadd.f32 0.0, %v1259
        %v1261 = vpop.f32.mrb[0].mxu0
        %1262 = vmatprep.mubr.bf16.mxu0 0
        %1263 = vmatmul.mubr.bf16.gmra.mrb[0].mxu0 %v1209
        %v1264 = vpop.f32.mrb[0].mxu0
        %v1265 = vadd.f32 0.0, %v1264
        %v1266 = vpop.f32.mrb[0].mxu0
        %v1267 = vpop.f32.mrb[0].mxu0
        %v1268 = vadd.f32 0.0, %v1267
        %v1269 = vpop.f32.mrb[0].mxu0
        %1270 = vmatprep.mubr.bf16.mxu0 0
        %1271 = vmatmul.mubr.bf16.gmra.mrb[0].mxu0 %v1212
        %v1272 = vpop.f32.mrb[0].mxu0
        %v1273 = vadd.f32 0.0, %v1272
        %v1274 = vpop.f32.mrb[0].mxu0
        %v1275 = vpop.f32.mrb[0].mxu0
        %v1276 = vadd.f32 0.0, %v1275
        %v1277 = vpop.f32.mrb[0].mxu0
        %1278 = vdwg.mxu0
        %1279 = vrot.lane.b32.xlu0 %v693, 64
        %v1280 = vpop.permute.xlu0 %1279
        %1281 = vrot.lane.b32.xlu0 %v696, 64
        %v1282 = vpop.permute.xlu0 %1281
        %1283 = vrot.lane.b32.xlu0 %v699, 64
        %v1284 = vpop.permute.xlu0 %1283
        %1285 = vrot.lane.b32.xlu0 %v702, 64
        %v1286 = vpop.permute.xlu0 %1285
        %1287 = vrot.lane.b32.xlu0 %v694, 64
        %v1288 = vpop.permute.xlu0 %1287
        %1289 = vrot.lane.b32.xlu0 %v697, 64
        %v1290 = vpop.permute.xlu0 %1289
        %1291 = vrot.lane.b32.xlu0 %v700, 64
        %v1292 = vpop.permute.xlu0 %1291
        %1293 = vrot.lane.b32.xlu0 %v703, 64
        %v1294 = vpop.permute.xlu0 %1293
        %v1296 = vsel %vm705, %v1280, 0
        %v1299 = vsel %vm705, %v1282, 0
        %v1302 = vsel %vm705, %v1284, 0
        %v1305 = vsel %vm705, %v1286, 0
        %v1308 = vsel %vm705, %v1288, 0
        %v1311 = vsel %vm705, %v1290, 0
        %v1314 = vsel %vm705, %v1292, 0
        %v1317 = vsel %vm705, %v1294, 0
        %1319 = vmatprep.subr.bf16.mxu0 0
        %1320 = vmatpush1.bf16.xpose.msra.mxu0 %v1308
        %1321 = vmatprep.subr.bf16.mxu0 0
        %1322 = vmatpush1.bf16.xpose.msra.mxu0 %v1311
        %1323 = vmatprep.subr.bf16.mxu0 0
        %1324 = vmatpush1.bf16.xpose.msra.mxu0 %v1314
        %1325 = vmatprep.subr.bf16.mxu0 0
        %1326 = vmatpush1.bf16.xpose.msra.mxu0 %v1317
        %1327 = vmatprep.subr.bf16.mxu0 0
        %1328 = vmatpush1.bf16.xpose.msra.mxu0 0
        %1329 = vmatprep.subr.bf16.mxu0 0
        %1330 = vmatpush1.bf16.xpose.msra.mxu0 0
        %1331 = vmatprep.subr.bf16.mxu0 0
        %1332 = vmatpush1.bf16.xpose.msra.mxu0 0
        %1333 = vmatprep.subr.bf16.mxu0 0
        %1334 = vmatpush1.bf16.xpose.msra.mxu0 0
        %1335 = vmatprep.subr.bf16.mxu0 0
        %1336 = vmatpush1.bf16.xpose.msra.mxu0 0
        %1337 = vmatprep.subr.bf16.mxu0 0
        %1338 = vmatpush1.bf16.xpose.msra.mxu0 0
        %1339 = vmatprep.subr.bf16.mxu0 0
        %1340 = vmatpush1.bf16.xpose.msra.mxu0 0
        %1341 = vmatprep.subr.bf16.mxu0 0
        %1342 = vmatpush1.bf16.xpose.msra.mxu0 0
        %1343 = vmatprep.subr.bf16.mxu0 0
        %1344 = vmatpush1.bf16.xpose.msra.mxu0 0
        %1345 = vmatprep.subr.bf16.mxu0 0
        %1346 = vmatpush1.bf16.xpose.msra.mxu0 0
        %1347 = vmatprep.subr.bf16.mxu0 0
        %1348 = vmatpush1.bf16.xpose.msra.mxu0 0
        %1349 = vmatprep.subr.bf16.mxu0 0
        %1350 = vmatpush1.bf16.xpose.msra.mxu0 0
        %1351 = vmatprep.mubr.bf16.mxu0 0
        %1352 = vmatmul.mubr.bf16.gmra.mrb[0].mxu0 %v1296
        %v1353 = vpop.f32.mrb[0].mxu0
        %v1354 = vadd.f32 0.0, %v1353
        %v1355 = vpop.f32.mrb[0].mxu0
        %v1356 = vpop.f32.mrb[0].mxu0
        %v1357 = vadd.f32 0.0, %v1356
        %v1358 = vpop.f32.mrb[0].mxu0
        %1359 = vmatprep.mubr.bf16.mxu0 0
        %1360 = vmatmul.mubr.bf16.gmra.mrb[0].mxu0 %v1299
        %v1361 = vpop.f32.mrb[0].mxu0
        %v1362 = vadd.f32 0.0, %v1361
        %v1363 = vpop.f32.mrb[0].mxu0
        %v1364 = vpop.f32.mrb[0].mxu0
        %v1365 = vadd.f32 0.0, %v1364
        %v1366 = vpop.f32.mrb[0].mxu0
        %1367 = vmatprep.mubr.bf16.mxu0 0
        %1368 = vmatmul.mubr.bf16.gmra.mrb[0].mxu0 %v1302
        %v1369 = vpop.f32.mrb[0].mxu0
        %v1370 = vadd.f32 0.0, %v1369
        %v1371 = vpop.f32.mrb[0].mxu0
        %v1372 = vpop.f32.mrb[0].mxu0
        %v1373 = vadd.f32 0.0, %v1372
        %v1374 = vpop.f32.mrb[0].mxu0
        %1375 = vmatprep.mubr.bf16.mxu0 0
        %1376 = vmatmul.mubr.bf16.gmra.mrb[0].mxu0 %v1305
        %v1377 = vpop.f32.mrb[0].mxu0
        %v1378 = vadd.f32 0.0, %v1377
        %v1379 = vpop.f32.mrb[0].mxu0
        %v1380 = vpop.f32.mrb[0].mxu0
        %v1381 = vadd.f32 0.0, %v1380
        %v1382 = vpop.f32.mrb[0].mxu0
        %1383 = vdwg.mxu0
        %v1384 = vmul.f32 %v1354, 0.17677669
        %v1385 = vmul.f32 %v1357, 0.17677669
        %v1386 = vmul.f32 %v1362, 0.17677669
        %v1387 = vmul.f32 %v1365, 0.17677669
        %v1388 = vmul.f32 %v1370, 0.17677669
        %v1389 = vmul.f32 %v1373, 0.17677669
        %v1390 = vmul.f32 %v1378, 0.17677669
        %v1391 = vmul.f32 %v1381, 0.17677669
        %v1392 = vsel %vm803, %v1384, -inf
        %1393 = vmax.xlane.f32.xlu0 %v1392
        %v1394 = vpop.xlane.xlu0 %1393
        %v1395 = vsel %vm803, %v1385, -inf
        %1396 = vmax.xlane.f32.xlu0 %v1395
        %v1397 = vpop.xlane.xlu0 %1396
        %v1398 = vsel %vm803, %v1386, -inf
        %1399 = vmax.xlane.f32.xlu0 %v1398
        %v1400 = vpop.xlane.xlu0 %1399
        %v1401 = vsel %vm803, %v1387, -inf
        %1402 = vmax.xlane.f32.xlu0 %v1401
        %v1403 = vpop.xlane.xlu0 %1402
        %v1404 = vsel %vm803, %v1388, -inf
        %1405 = vmax.xlane.f32.xlu0 %v1404
        %v1406 = vpop.xlane.xlu0 %1405
        %v1407 = vsel %vm803, %v1389, -inf
        %1408 = vmax.xlane.f32.xlu0 %v1407
        %v1409 = vpop.xlane.xlu0 %1408
        %v1410 = vsel %vm803, %v1390, -inf
        %1411 = vmax.xlane.f32.xlu0 %v1410
        %v1412 = vpop.xlane.xlu0 %1411
        %v1413 = vsel %vm803, %v1391, -inf
        %1414 = vmax.xlane.f32.xlu0 %v1413
        %v1415 = vpop.xlane.xlu0 %1414
        %v1416 = vsub.f32 %v1384, %v1394
        %v1417 = vsub.f32 %v1385, %v1397
        %v1418 = vsub.f32 %v1386, %v1400
        %v1419 = vsub.f32 %v1387, %v1403
        %v1420 = vsub.f32 %v1388, %v1406
        %v1421 = vsub.f32 %v1389, %v1409
        %v1422 = vsub.f32 %v1390, %v1412
        %v1423 = vsub.f32 %v1391, %v1415
        %v1424 = vmul.f32 %v1416, 1.442695
        %v1425 = vpow.pop %v1424
        %v1426 = vmul.f32 %v1417, 1.442695
        %v1427 = vpow.pop %v1426
        %v1428 = vmul.f32 %v1418, 1.442695
        %v1429 = vpow.pop %v1428
        %v1430 = vmul.f32 %v1419, 1.442695
        %v1431 = vpow.pop %v1430
        %v1432 = vmul.f32 %v1420, 1.442695
        %v1433 = vpow.pop %v1432
        %v1434 = vmul.f32 %v1421, 1.442695
        %v1435 = vpow.pop %v1434
        %v1436 = vmul.f32 %v1422, 1.442695
        %v1437 = vpow.pop %v1436
        %v1438 = vmul.f32 %v1423, 1.442695
        %v1439 = vpow.pop %v1438
        %v1440 = vsel %vm803, %v1425, 0.0
        %1441 = vadd.xlane.f32.xlu0 %v1440
        %v1442 = vpop.xlane.xlu0 %1441
        %v1443 = vsel %vm803, %v1427, 0.0
        %1444 = vadd.xlane.f32.xlu0 %v1443
        %v1445 = vpop.xlane.xlu0 %1444
        %v1446 = vsel %vm803, %v1429, 0.0
        %1447 = vadd.xlane.f32.xlu0 %v1446
        %v1448 = vpop.xlane.xlu0 %1447
        %v1449 = vsel %vm803, %v1431, 0.0
        %1450 = vadd.xlane.f32.xlu0 %v1449
        %v1451 = vpop.xlane.xlu0 %1450
        %v1452 = vsel %vm803, %v1433, 0.0
        %1453 = vadd.xlane.f32.xlu0 %v1452
        %v1454 = vpop.xlane.xlu0 %1453
        %v1455 = vsel %vm803, %v1435, 0.0
        %1456 = vadd.xlane.f32.xlu0 %v1455
        %v1457 = vpop.xlane.xlu0 %1456
        %v1458 = vsel %vm803, %v1437, 0.0
        %1459 = vadd.xlane.f32.xlu0 %v1458
        %v1460 = vpop.xlane.xlu0 %1459
        %v1461 = vsel %vm803, %v1439, 0.0
        %1462 = vadd.xlane.f32.xlu0 %v1461
        %v1463 = vpop.xlane.xlu0 %1462
        %v1464 = vrcp.pop %v1442
        %v1465 = vrcp.pop %v1445
        %v1466 = vrcp.pop %v1448
        %v1467 = vrcp.pop %v1451
        %v1468 = vrcp.pop %v1454
        %v1469 = vrcp.pop %v1457
        %v1470 = vrcp.pop %v1460
        %v1471 = vrcp.pop %v1463
        %v1472 = vmul.f32 %v1425, %v1464
        %v1473 = vmul.f32 %v1427, %v1465
        %v1474 = vmul.f32 %v1429, %v1466
        %v1475 = vmul.f32 %v1431, %v1467
        %v1476 = vmul.f32 %v1433, %v1468
        %v1477 = vmul.f32 %v1435, %v1469
        %v1478 = vmul.f32 %v1437, %v1470
        %v1479 = vmul.f32 %v1439, %v1471
        %v1480 = vpack.c.bf16 %v1473, %v1472
        %v1481 = vpack.c.bf16 %v1475, %v1474
        %v1482 = vpack.c.bf16 %v1477, %v1476
        %v1483 = vpack.c.bf16 %v1479, %v1478
        %1484 = vrot.lane.b32.xlu0 %v695, 64
        %v1485 = vpop.permute.xlu0 %1484
        %1486 = vrot.lane.b32.xlu0 %v698, 64
        %v1487 = vpop.permute.xlu0 %1486
        %1488 = vrot.lane.b32.xlu0 %v701, 64
        %v1489 = vpop.permute.xlu0 %1488
        %1490 = vrot.lane.b32.xlu0 %v704, 64
        %v1491 = vpop.permute.xlu0 %1490
        %v1497 = vsel %vm803, %v1480, 0
        %v1500 = vsel %vm803, %v1481, 0
        %v1503 = vsel %vm803, %v1482, 0
        %v1506 = vsel %vm803, %v1483, 0
        %1508 = vmatprep.subr.bf16.mxu0 0
        %1509 = vmatpush1.bf16.msra.mxu0 %v1485
        %1510 = vmatprep.subr.bf16.mxu0 0
        %1511 = vmatpush1.bf16.msra.mxu0 %v1487
        %1512 = vmatprep.subr.bf16.mxu0 0
        %1513 = vmatpush1.bf16.msra.mxu0 %v1489
        %1514 = vmatprep.subr.bf16.mxu0 0
        %1515 = vmatpush1.bf16.msra.mxu0 %v1491
        %1516 = vmatprep.subr.bf16.mxu0 0
        %1517 = vmatpush1.bf16.msra.mxu0 0
        %1518 = vmatprep.subr.bf16.mxu0 0
        %1519 = vmatpush1.bf16.msra.mxu0 0
        %1520 = vmatprep.subr.bf16.mxu0 0
        %1521 = vmatpush1.bf16.msra.mxu0 0
        %1522 = vmatprep.subr.bf16.mxu0 0
        %1523 = vmatpush1.bf16.msra.mxu0 0
        %1524 = vmatprep.subr.bf16.mxu0 0
        %1525 = vmatpush1.bf16.msra.mxu0 0
        %1526 = vmatprep.subr.bf16.mxu0 0
        %1527 = vmatpush1.bf16.msra.mxu0 0
        %1528 = vmatprep.subr.bf16.mxu0 0
        %1529 = vmatpush1.bf16.msra.mxu0 0
        %1530 = vmatprep.subr.bf16.mxu0 0
        %1531 = vmatpush1.bf16.msra.mxu0 0
        %1532 = vmatprep.subr.bf16.mxu0 0
        %1533 = vmatpush1.bf16.msra.mxu0 0
        %1534 = vmatprep.subr.bf16.mxu0 0
        %1535 = vmatpush1.bf16.msra.mxu0 0
        %1536 = vmatprep.subr.bf16.mxu0 0
        %1537 = vmatpush1.bf16.msra.mxu0 0
        %1538 = vmatprep.subr.bf16.mxu0 0
        %1539 = vmatpush1.bf16.msra.mxu0 0
        %1540 = vmatprep.mubr.bf16.mxu0 0
        %1541 = vmatmul.mubr.bf16.gmra.mrb[0].mxu0 %v1497
        %v1542 = vpop.f32.mrb[0].mxu0
        %v1543 = vadd.f32 0.0, %v1542
        %v1544 = vpop.f32.mrb[0].mxu0
        %v1545 = vpop.f32.mrb[0].mxu0
        %v1546 = vadd.f32 0.0, %v1545
        %v1547 = vpop.f32.mrb[0].mxu0
        %1548 = vmatprep.mubr.bf16.mxu0 0
        %1549 = vmatmul.mubr.bf16.gmra.mrb[0].mxu0 %v1500
        %v1550 = vpop.f32.mrb[0].mxu0
        %v1551 = vadd.f32 0.0, %v1550
        %v1552 = vpop.f32.mrb[0].mxu0
        %v1553 = vpop.f32.mrb[0].mxu0
        %v1554 = vadd.f32 0.0, %v1553
        %v1555 = vpop.f32.mrb[0].mxu0
        %1556 = vmatprep.mubr.bf16.mxu0 0
        %1557 = vmatmul.mubr.bf16.gmra.mrb[0].mxu0 %v1503
        %v1558 = vpop.f32.mrb[0].mxu0
        %v1559 = vadd.f32 0.0, %v1558
        %v1560 = vpop.f32.mrb[0].mxu0
        %v1561 = vpop.f32.mrb[0].mxu0
        %v1562 = vadd.f32 0.0, %v1561
        %v1563 = vpop.f32.mrb[0].mxu0
        %1564 = vmatprep.mubr.bf16.mxu0 0
        %1565 = vmatmul.mubr.bf16.gmra.mrb[0].mxu0 %v1506
        %v1566 = vpop.f32.mrb[0].mxu0
        %v1567 = vadd.f32 0.0, %v1566
        %v1568 = vpop.f32.mrb[0].mxu0
        %v1569 = vpop.f32.mrb[0].mxu0
        %v1570 = vadd.f32 0.0, %v1569
        %v1571 = vpop.f32.mrb[0].mxu0
        %1572 = vdwg.mxu0
        %1573 = vrot.lane.b32.xlu0 %v693, 32
        %v1574 = vpop.permute.xlu0 %1573
        %1575 = vrot.lane.b32.xlu0 %v696, 32
        %v1576 = vpop.permute.xlu0 %1575
        %1577 = vrot.lane.b32.xlu0 %v699, 32
        %v1578 = vpop.permute.xlu0 %1577
        %1579 = vrot.lane.b32.xlu0 %v702, 32
        %v1580 = vpop.permute.xlu0 %1579
        %1581 = vrot.lane.b32.xlu0 %v694, 32
        %v1582 = vpop.permute.xlu0 %1581
        %1583 = vrot.lane.b32.xlu0 %v697, 32
        %v1584 = vpop.permute.xlu0 %1583
        %1585 = vrot.lane.b32.xlu0 %v700, 32
        %v1586 = vpop.permute.xlu0 %1585
        %1587 = vrot.lane.b32.xlu0 %v703, 32
        %v1588 = vpop.permute.xlu0 %1587
        %v1590 = vsel %vm705, %v1574, 0
        %v1593 = vsel %vm705, %v1576, 0
        %v1596 = vsel %vm705, %v1578, 0
        %v1599 = vsel %vm705, %v1580, 0
        %v1602 = vsel %vm705, %v1582, 0
        %v1605 = vsel %vm705, %v1584, 0
        %v1608 = vsel %vm705, %v1586, 0
        %v1611 = vsel %vm705, %v1588, 0
        %1613 = vmatprep.subr.bf16.mxu0 0
        %1614 = vmatpush1.bf16.xpose.msra.mxu0 %v1602
        %1615 = vmatprep.subr.bf16.mxu0 0
        %1616 = vmatpush1.bf16.xpose.msra.mxu0 %v1605
        %1617 = vmatprep.subr.bf16.mxu0 0
        %1618 = vmatpush1.bf16.xpose.msra.mxu0 %v1608
        %1619 = vmatprep.subr.bf16.mxu0 0
        %1620 = vmatpush1.bf16.xpose.msra.mxu0 %v1611
        %1621 = vmatprep.subr.bf16.mxu0 0
        %1622 = vmatpush1.bf16.xpose.msra.mxu0 0
        %1623 = vmatprep.subr.bf16.mxu0 0
        %1624 = vmatpush1.bf16.xpose.msra.mxu0 0
        %1625 = vmatprep.subr.bf16.mxu0 0
        %1626 = vmatpush1.bf16.xpose.msra.mxu0 0
        %1627 = vmatprep.subr.bf16.mxu0 0
        %1628 = vmatpush1.bf16.xpose.msra.mxu0 0
        %1629 = vmatprep.subr.bf16.mxu0 0
        %1630 = vmatpush1.bf16.xpose.msra.mxu0 0
        %1631 = vmatprep.subr.bf16.mxu0 0
        %1632 = vmatpush1.bf16.xpose.msra.mxu0 0
        %1633 = vmatprep.subr.bf16.mxu0 0
        %1634 = vmatpush1.bf16.xpose.msra.mxu0 0
        %1635 = vmatprep.subr.bf16.mxu0 0
        %1636 = vmatpush1.bf16.xpose.msra.mxu0 0
        %1637 = vmatprep.subr.bf16.mxu0 0
        %1638 = vmatpush1.bf16.xpose.msra.mxu0 0
        %1639 = vmatprep.subr.bf16.mxu0 0
        %1640 = vmatpush1.bf16.xpose.msra.mxu0 0
        %1641 = vmatprep.subr.bf16.mxu0 0
        %1642 = vmatpush1.bf16.xpose.msra.mxu0 0
        %1643 = vmatprep.subr.bf16.mxu0 0
        %1644 = vmatpush1.bf16.xpose.msra.mxu0 0
        %1645 = vmatprep.mubr.bf16.mxu0 0
        %1646 = vmatmul.mubr.bf16.gmra.mrb[0].mxu0 %v1590
        %v1647 = vpop.f32.mrb[0].mxu0
        %v1648 = vadd.f32 0.0, %v1647
        %v1649 = vpop.f32.mrb[0].mxu0
        %v1650 = vpop.f32.mrb[0].mxu0
        %v1651 = vadd.f32 0.0, %v1650
        %v1652 = vpop.f32.mrb[0].mxu0
        %1653 = vmatprep.mubr.bf16.mxu0 0
        %1654 = vmatmul.mubr.bf16.gmra.mrb[0].mxu0 %v1593
        %v1655 = vpop.f32.mrb[0].mxu0
        %v1656 = vadd.f32 0.0, %v1655
        %v1657 = vpop.f32.mrb[0].mxu0
        %v1658 = vpop.f32.mrb[0].mxu0
        %v1659 = vadd.f32 0.0, %v1658
        %v1660 = vpop.f32.mrb[0].mxu0
        %1661 = vmatprep.mubr.bf16.mxu0 0
        %1662 = vmatmul.mubr.bf16.gmra.mrb[0].mxu0 %v1596
        %v1663 = vpop.f32.mrb[0].mxu0
        %v1664 = vadd.f32 0.0, %v1663
        %v1665 = vpop.f32.mrb[0].mxu0
        %v1666 = vpop.f32.mrb[0].mxu0
        %v1667 = vadd.f32 0.0, %v1666
        %v1668 = vpop.f32.mrb[0].mxu0
        %1669 = vmatprep.mubr.bf16.mxu0 0
        %1670 = vmatmul.mubr.bf16.gmra.mrb[0].mxu0 %v1599
        %v1671 = vpop.f32.mrb[0].mxu0
        %v1672 = vadd.f32 0.0, %v1671
        %v1673 = vpop.f32.mrb[0].mxu0
        %v1674 = vpop.f32.mrb[0].mxu0
        %v1675 = vadd.f32 0.0, %v1674
        %v1676 = vpop.f32.mrb[0].mxu0
        %1677 = vdwg.mxu0
        %v1678 = vmul.f32 %v1648, 0.17677669
        %v1679 = vmul.f32 %v1651, 0.17677669
        %v1680 = vmul.f32 %v1656, 0.17677669
        %v1681 = vmul.f32 %v1659, 0.17677669
        %v1682 = vmul.f32 %v1664, 0.17677669
        %v1683 = vmul.f32 %v1667, 0.17677669
        %v1684 = vmul.f32 %v1672, 0.17677669
        %v1685 = vmul.f32 %v1675, 0.17677669
        %v1686 = vsel %vm803, %v1678, -inf
        %1687 = vmax.xlane.f32.xlu0 %v1686
        %v1688 = vpop.xlane.xlu0 %1687
        %v1689 = vsel %vm803, %v1679, -inf
        %1690 = vmax.xlane.f32.xlu0 %v1689
        %v1691 = vpop.xlane.xlu0 %1690
        %v1692 = vsel %vm803, %v1680, -inf
        %1693 = vmax.xlane.f32.xlu0 %v1692
        %v1694 = vpop.xlane.xlu0 %1693
        %v1695 = vsel %vm803, %v1681, -inf
        %1696 = vmax.xlane.f32.xlu0 %v1695
        %v1697 = vpop.xlane.xlu0 %1696
        %v1698 = vsel %vm803, %v1682, -inf
        %1699 = vmax.xlane.f32.xlu0 %v1698
        %v1700 = vpop.xlane.xlu0 %1699
        %v1701 = vsel %vm803, %v1683, -inf
        %1702 = vmax.xlane.f32.xlu0 %v1701
        %v1703 = vpop.xlane.xlu0 %1702
        %v1704 = vsel %vm803, %v1684, -inf
        %1705 = vmax.xlane.f32.xlu0 %v1704
        %v1706 = vpop.xlane.xlu0 %1705
        %v1707 = vsel %vm803, %v1685, -inf
        %1708 = vmax.xlane.f32.xlu0 %v1707
        %v1709 = vpop.xlane.xlu0 %1708
        %v1710 = vsub.f32 %v1678, %v1688
        %v1711 = vsub.f32 %v1679, %v1691
        %v1712 = vsub.f32 %v1680, %v1694
        %v1713 = vsub.f32 %v1681, %v1697
        %v1714 = vsub.f32 %v1682, %v1700
        %v1715 = vsub.f32 %v1683, %v1703
        %v1716 = vsub.f32 %v1684, %v1706
        %v1717 = vsub.f32 %v1685, %v1709
        %v1718 = vmul.f32 %v1710, 1.442695
        %v1719 = vpow.pop %v1718
        %v1720 = vmul.f32 %v1711, 1.442695
        %v1721 = vpow.pop %v1720
        %v1722 = vmul.f32 %v1712, 1.442695
        %v1723 = vpow.pop %v1722
        %v1724 = vmul.f32 %v1713, 1.442695
        %v1725 = vpow.pop %v1724
        %v1726 = vmul.f32 %v1714, 1.442695
        %v1727 = vpow.pop %v1726
        %v1728 = vmul.f32 %v1715, 1.442695
        %v1729 = vpow.pop %v1728
        %v1730 = vmul.f32 %v1716, 1.442695
        %v1731 = vpow.pop %v1730
        %v1732 = vmul.f32 %v1717, 1.442695
        %v1733 = vpow.pop %v1732
        %v1734 = vsel %vm803, %v1719, 0.0
        %1735 = vadd.xlane.f32.xlu0 %v1734
        %v1736 = vpop.xlane.xlu0 %1735
        %v1737 = vsel %vm803, %v1721, 0.0
        %1738 = vadd.xlane.f32.xlu0 %v1737
        %v1739 = vpop.xlane.xlu0 %1738
        %v1740 = vsel %vm803, %v1723, 0.0
        %1741 = vadd.xlane.f32.xlu0 %v1740
        %v1742 = vpop.xlane.xlu0 %1741
        %v1743 = vsel %vm803, %v1725, 0.0
        %1744 = vadd.xlane.f32.xlu0 %v1743
        %v1745 = vpop.xlane.xlu0 %1744
        %v1746 = vsel %vm803, %v1727, 0.0
        %1747 = vadd.xlane.f32.xlu0 %v1746
        %v1748 = vpop.xlane.xlu0 %1747
        %v1749 = vsel %vm803, %v1729, 0.0
        %1750 = vadd.xlane.f32.xlu0 %v1749
        %v1751 = vpop.xlane.xlu0 %1750
        %v1752 = vsel %vm803, %v1731, 0.0
        %1753 = vadd.xlane.f32.xlu0 %v1752
        %v1754 = vpop.xlane.xlu0 %1753
        %v1755 = vsel %vm803, %v1733, 0.0
        %1756 = vadd.xlane.f32.xlu0 %v1755
        %v1757 = vpop.xlane.xlu0 %1756
        %v1758 = vrcp.pop %v1736
        %v1759 = vrcp.pop %v1739
        %v1760 = vrcp.pop %v1742
        %v1761 = vrcp.pop %v1745
        %v1762 = vrcp.pop %v1748
        %v1763 = vrcp.pop %v1751
        %v1764 = vrcp.pop %v1754
        %v1765 = vrcp.pop %v1757
        %v1766 = vmul.f32 %v1719, %v1758
        %v1767 = vmul.f32 %v1721, %v1759
        %v1768 = vmul.f32 %v1723, %v1760
        %v1769 = vmul.f32 %v1725, %v1761
        %v1770 = vmul.f32 %v1727, %v1762
        %v1771 = vmul.f32 %v1729, %v1763
        %v1772 = vmul.f32 %v1731, %v1764
        %v1773 = vmul.f32 %v1733, %v1765
        %v1774 = vpack.c.bf16 %v1767, %v1766
        %v1775 = vpack.c.bf16 %v1769, %v1768
        %v1776 = vpack.c.bf16 %v1771, %v1770
        %v1777 = vpack.c.bf16 %v1773, %v1772
        %1778 = vrot.lane.b32.xlu0 %v695, 32
        %v1779 = vpop.permute.xlu0 %1778
        %1780 = vrot.lane.b32.xlu0 %v698, 32
        %v1781 = vpop.permute.xlu0 %1780
        %1782 = vrot.lane.b32.xlu0 %v701, 32
        %v1783 = vpop.permute.xlu0 %1782
        %1784 = vrot.lane.b32.xlu0 %v704, 32
        %v1785 = vpop.permute.xlu0 %1784
        %v1791 = vsel %vm803, %v1774, 0
        %v1794 = vsel %vm803, %v1775, 0
        %v1797 = vsel %vm803, %v1776, 0
        %v1800 = vsel %vm803, %v1777, 0
        %1802 = vmatprep.subr.bf16.mxu0 0
        %1803 = vmatpush1.bf16.msra.mxu0 %v1779
        %1804 = vmatprep.subr.bf16.mxu0 0
        %1805 = vmatpush1.bf16.msra.mxu0 %v1781
        %1806 = vmatprep.subr.bf16.mxu0 0
        %1807 = vmatpush1.bf16.msra.mxu0 %v1783
        %1808 = vmatprep.subr.bf16.mxu0 0
        %1809 = vmatpush1.bf16.msra.mxu0 %v1785
        %1810 = vmatprep.subr.bf16.mxu0 0
        %1811 = vmatpush1.bf16.msra.mxu0 0
        %1812 = vmatprep.subr.bf16.mxu0 0
        %1813 = vmatpush1.bf16.msra.mxu0 0
        %1814 = vmatprep.subr.bf16.mxu0 0
        %1815 = vmatpush1.bf16.msra.mxu0 0
        %1816 = vmatprep.subr.bf16.mxu0 0
        %1817 = vmatpush1.bf16.msra.mxu0 0
        %1818 = vmatprep.subr.bf16.mxu0 0
        %1819 = vmatpush1.bf16.msra.mxu0 0
        %1820 = vmatprep.subr.bf16.mxu0 0
        %1821 = vmatpush1.bf16.msra.mxu0 0
        %1822 = vmatprep.subr.bf16.mxu0 0
        %1823 = vmatpush1.bf16.msra.mxu0 0
        %1824 = vmatprep.subr.bf16.mxu0 0
        %1825 = vmatpush1.bf16.msra.mxu0 0
        %1826 = vmatprep.subr.bf16.mxu0 0
        %1827 = vmatpush1.bf16.msra.mxu0 0
        %1828 = vmatprep.subr.bf16.mxu0 0
        %1829 = vmatpush1.bf16.msra.mxu0 0
        %1830 = vmatprep.subr.bf16.mxu0 0
        %1831 = vmatpush1.bf16.msra.mxu0 0
        %1832 = vmatprep.subr.bf16.mxu0 0
        %1833 = vmatpush1.bf16.msra.mxu0 0
        %1834 = vmatprep.mubr.bf16.mxu0 0
        %1835 = vmatmul.mubr.bf16.gmra.mrb[0].mxu0 %v1791
        %v1836 = vpop.f32.mrb[0].mxu0
        %v1837 = vadd.f32 0.0, %v1836
        %v1838 = vpop.f32.mrb[0].mxu0
        %v1839 = vpop.f32.mrb[0].mxu0
        %v1840 = vadd.f32 0.0, %v1839
        %v1841 = vpop.f32.mrb[0].mxu0
        %1842 = vmatprep.mubr.bf16.mxu0 0
        %1843 = vmatmul.mubr.bf16.gmra.mrb[0].mxu0 %v1794
        %v1844 = vpop.f32.mrb[0].mxu0
        %v1845 = vadd.f32 0.0, %v1844
        %v1846 = vpop.f32.mrb[0].mxu0
        %v1847 = vpop.f32.mrb[0].mxu0
        %v1848 = vadd.f32 0.0, %v1847
        %v1849 = vpop.f32.mrb[0].mxu0
        %1850 = vmatprep.mubr.bf16.mxu0 0
        %1851 = vmatmul.mubr.bf16.gmra.mrb[0].mxu0 %v1797
        %v1852 = vpop.f32.mrb[0].mxu0
        %v1853 = vadd.f32 0.0, %v1852
        %v1854 = vpop.f32.mrb[0].mxu0
        %v1855 = vpop.f32.mrb[0].mxu0
        %v1856 = vadd.f32 0.0, %v1855
        %v1857 = vpop.f32.mrb[0].mxu0
        %1858 = vmatprep.mubr.bf16.mxu0 0
        %1859 = vmatmul.mubr.bf16.gmra.mrb[0].mxu0 %v1800
        %v1860 = vpop.f32.mrb[0].mxu0
        %v1861 = vadd.f32 0.0, %v1860
        %v1862 = vpop.f32.mrb[0].mxu0
        %v1863 = vpop.f32.mrb[0].mxu0
        %v1864 = vadd.f32 0.0, %v1863
        %v1865 = vpop.f32.mrb[0].mxu0
        %1866 = vdwg.mxu0
        %1875 = vrot.lane.b32.xlu0 %v1249, 32
        %v1876 = vpop.permute.xlu0 %1875
        %1877 = vrot.lane.b32.xlu0 %v1252, 32
        %v1878 = vpop.permute.xlu0 %1877
        %1879 = vrot.lane.b32.xlu0 %v1257, 32
        %v1880 = vpop.permute.xlu0 %1879
        %1881 = vrot.lane.b32.xlu0 %v1260, 32
        %v1882 = vpop.permute.xlu0 %1881
        %1883 = vrot.lane.b32.xlu0 %v1265, 32
        %v1884 = vpop.permute.xlu0 %1883
        %1885 = vrot.lane.b32.xlu0 %v1268, 32
        %v1886 = vpop.permute.xlu0 %1885
        %1887 = vrot.lane.b32.xlu0 %v1273, 32
        %v1888 = vpop.permute.xlu0 %1887
        %1889 = vrot.lane.b32.xlu0 %v1276, 32
        %v1890 = vpop.permute.xlu0 %1889
        %1907 = vrot.lane.b32.xlu0 %v1543, 64
        %v1908 = vpop.permute.xlu0 %1907
        %1909 = vrot.lane.b32.xlu0 %v1546, 64
        %v1910 = vpop.permute.xlu0 %1909
        %1911 = vrot.lane.b32.xlu0 %v1551, 64
        %v1912 = vpop.permute.xlu0 %1911
        %1913 = vrot.lane.b32.xlu0 %v1554, 64
        %v1914 = vpop.permute.xlu0 %1913
        %1915 = vrot.lane.b32.xlu0 %v1559, 64
        %v1916 = vpop.permute.xlu0 %1915
        %1917 = vrot.lane.b32.xlu0 %v1562, 64
        %v1918 = vpop.permute.xlu0 %1917
        %1919 = vrot.lane.b32.xlu0 %v1567, 64
        %v1920 = vpop.permute.xlu0 %1919
        %1921 = vrot.lane.b32.xlu0 %v1570, 64
        %v1922 = vpop.permute.xlu0 %1921
        %1939 = vrot.lane.b32.xlu0 %v1837, 96
        %v1940 = vpop.permute.xlu0 %1939
        %1941 = vrot.lane.b32.xlu0 %v1840, 96
        %v1942 = vpop.permute.xlu0 %1941
        %1943 = vrot.lane.b32.xlu0 %v1845, 96
        %v1944 = vpop.permute.xlu0 %1943
        %1945 = vrot.lane.b32.xlu0 %v1848, 96
        %v1946 = vpop.permute.xlu0 %1945
        %1947 = vrot.lane.b32.xlu0 %v1853, 96
        %v1948 = vpop.permute.xlu0 %1947
        %1949 = vrot.lane.b32.xlu0 %v1856, 96
        %v1950 = vpop.permute.xlu0 %1949
        %1951 = vrot.lane.b32.xlu0 %v1861, 96
        %v1952 = vpop.permute.xlu0 %1951
        %1953 = vrot.lane.b32.xlu0 %v1864, 96
        %v1954 = vpop.permute.xlu0 %1953
        %v1963 = vsel %vm705, %v943, %v1876
        %v1964 = vsel %vm705, %v946, %v1878
        %v1965 = vsel %vm705, %v951, %v1880
        %v1966 = vsel %vm705, %v954, %v1882
        %v1967 = vsel %vm705, %v959, %v1884
        %v1968 = vsel %vm705, %v962, %v1886
        %v1969 = vsel %vm705, %v967, %v1888
        %v1970 = vsel %vm705, %v970, %v1890
        %v1971 = vsel %vm803, %v1963, %v1908
        %v1972 = vsel %vm803, %v1964, %v1910
        %v1973 = vsel %vm803, %v1965, %v1912
        %v1974 = vsel %vm803, %v1966, %v1914
        %v1975 = vsel %vm803, %v1967, %v1916
        %v1976 = vsel %vm803, %v1968, %v1918
        %v1977 = vsel %vm803, %v1969, %v1920
        %v1978 = vsel %vm803, %v1970, %v1922
        %vm1979 = vcmask 785408
        %v1980 = vsel %vm1979, %v1971, %v1940
        %v1981 = vsel %vm1979, %v1972, %v1942
        %v1982 = vsel %vm1979, %v1973, %v1944
        %v1983 = vsel %vm1979, %v1974, %v1946
        %v1984 = vsel %vm1979, %v1975, %v1948
        %v1985 = vsel %vm1979, %v1976, %v1950
        %v1986 = vsel %vm1979, %v1977, %v1952
        %v1987 = vsel %vm1979, %v1978, %v1954
        %v1988 = vpack.c.bf16 %v1981, %v1980
        %v1989 = vpack.c.bf16 %v1983, %v1982
        %v1990 = vpack.c.bf16 %v1985, %v1984
        %v1991 = vpack.c.bf16 %v1987, %v1986
        %v1992 = vld [vmem:[%s3] sm:$0xf]
        %v1993 = vld [vmem:[%s3 + $0x4] sm:$0xf]
        %v1994 = vld [vmem:[%s3 + $0x8] sm:$0xf]
        %v1995 = vld [vmem:[%s3 + $0xc] sm:$0xf]
        %v1996 = vld [vmem:[%s3 + $0x10] sm:$0xf]
        %v1997 = vld [vmem:[%s3 + $0x14] sm:$0xf]
        %v1998 = vld [vmem:[%s3 + $0x18] sm:$0xf]
        %v1999 = vld [vmem:[%s3 + $0x1c] sm:$0xf]
        %v2000 = vld [vmem:[%s3 + $0x20] sm:$0xf]
        %v2001 = vld [vmem:[%s3 + $0x24] sm:$0xf]
        %v2002 = vld [vmem:[%s3 + $0x28] sm:$0xf]
        %v2003 = vld [vmem:[%s3 + $0x2c] sm:$0xf]
        %v2004 = vld [vmem:[%s3 + $0x30] sm:$0xf]
        %v2005 = vld [vmem:[%s3 + $0x34] sm:$0xf]
        %v2006 = vld [vmem:[%s3 + $0x38] sm:$0xf]
        %v2007 = vld [vmem:[%s3 + $0x3c] sm:$0xf]
        %v2008 = vld [vmem:[%s4] sm:$0x1]
        %v2010 = vlaneseq
        %v2011 = vshrl.u32 %v2010, 7
        %v2012 = vsub.s32 0, %v2011
        %v2013 = vrot.slane %v2008, %v2012
        %v2031 = vunpack.c.l.b16 %v1992
        %v2032 = vunpack.c.l.b16 %v1993
        %v2033 = vunpack.c.l.b16 %v1994
        %v2034 = vunpack.c.l.b16 %v1995
        %v2035 = vunpack.c.l.b16 %v1996
        %v2036 = vunpack.c.l.b16 %v1997
        %v2037 = vunpack.c.l.b16 %v1998
        %v2038 = vunpack.c.l.b16 %v1999
        %v2039 = vunpack.c.l.b16 %v2000
        %v2040 = vunpack.c.l.b16 %v2001
        %v2041 = vunpack.c.l.b16 %v2002
        %v2042 = vunpack.c.l.b16 %v2003
        %v2043 = vunpack.c.l.b16 %v2004
        %v2044 = vunpack.c.l.b16 %v2005
        %v2045 = vunpack.c.l.b16 %v2006
        %v2046 = vunpack.c.l.b16 %v2007
        %v2047 = vpack.c.b16 %v2032, %v2031
        %v2048 = vpack.c.b16 %v2034, %v2033
        %v2049 = vpack.c.b16 %v2036, %v2035
        %v2050 = vpack.c.b16 %v2038, %v2037
        %v2051 = vpack.c.b16 %v2040, %v2039
        %v2052 = vpack.c.b16 %v2042, %v2041
        %v2053 = vpack.c.b16 %v2044, %v2043
        %v2054 = vpack.c.b16 %v2046, %v2045
        %2063 = vmatprep.subr.bf16.mxu0 0
        %2064 = vmatpush1.bf16.msra.mxu0 %v2047
        %2065 = vmatprep.subr.bf16.mxu0 0
        %2066 = vmatpush1.bf16.msra.mxu0 %v2048
        %2067 = vmatprep.subr.bf16.mxu0 0
        %2068 = vmatpush1.bf16.msra.mxu0 %v2049
        %2069 = vmatprep.subr.bf16.mxu0 0
        %2070 = vmatpush1.bf16.msra.mxu0 %v2050
        %2071 = vmatprep.subr.bf16.mxu0 0
        %2072 = vmatpush1.bf16.msra.mxu0 %v2051
        %2073 = vmatprep.subr.bf16.mxu0 0
        %2074 = vmatpush1.bf16.msra.mxu0 %v2052
        %2075 = vmatprep.subr.bf16.mxu0 0
        %2076 = vmatpush1.bf16.msra.mxu0 %v2053
        %2077 = vmatprep.subr.bf16.mxu0 0
        %2078 = vmatpush1.bf16.msra.mxu0 %v2054
        %2079 = vmatprep.subr.bf16.mxu0 0
        %2080 = vmatpush1.bf16.msra.mxu0 0
        %2081 = vmatprep.subr.bf16.mxu0 0
        %2082 = vmatpush1.bf16.msra.mxu0 0
        %2083 = vmatprep.subr.bf16.mxu0 0
        %2084 = vmatpush1.bf16.msra.mxu0 0
        %2085 = vmatprep.subr.bf16.mxu0 0
        %2086 = vmatpush1.bf16.msra.mxu0 0
        %2087 = vmatprep.subr.bf16.mxu0 0
        %2088 = vmatpush1.bf16.msra.mxu0 0
        %2089 = vmatprep.subr.bf16.mxu0 0
        %2090 = vmatpush1.bf16.msra.mxu0 0
        %2091 = vmatprep.subr.bf16.mxu0 0
        %2092 = vmatpush1.bf16.msra.mxu0 0
        %2093 = vmatprep.subr.bf16.mxu0 0
        %2094 = vmatpush1.bf16.msra.mxu0 0
        %2095 = vmatprep.mubr.bf16.mxu0 0
        %2096 = vmatmul.mubr.bf16.gmra.mrb[0].mxu0 %v1988
        %v2097 = vpop.f32.mrb[0].mxu0
        %v2098 = vadd.f32 %v2013, %v2097
        %v2099 = vpop.f32.mrb[0].mxu0
        %v2100 = vpop.f32.mrb[0].mxu0
        %v2101 = vadd.f32 %v2013, %v2100
        %v2102 = vpop.f32.mrb[0].mxu0
        %2103 = vmatprep.mubr.bf16.mxu0 0
        %2104 = vmatmul.mubr.bf16.gmra.mrb[0].mxu0 %v1989
        %v2105 = vpop.f32.mrb[0].mxu0
        %v2106 = vadd.f32 %v2013, %v2105
        %v2107 = vpop.f32.mrb[0].mxu0
        %v2108 = vpop.f32.mrb[0].mxu0
        %v2109 = vadd.f32 %v2013, %v2108
        %v2110 = vpop.f32.mrb[0].mxu0
        %2111 = vmatprep.mubr.bf16.mxu0 0
        %2112 = vmatmul.mubr.bf16.gmra.mrb[0].mxu0 %v1990
        %v2113 = vpop.f32.mrb[0].mxu0
        %v2114 = vadd.f32 %v2013, %v2113
        %v2115 = vpop.f32.mrb[0].mxu0
        %v2116 = vpop.f32.mrb[0].mxu0
        %v2117 = vadd.f32 %v2013, %v2116
        %v2118 = vpop.f32.mrb[0].mxu0
        %2119 = vmatprep.mubr.bf16.mxu0 0
        %2120 = vmatmul.mubr.bf16.gmra.mrb[0].mxu0 %v1991
        %v2121 = vpop.f32.mrb[0].mxu0
        %v2122 = vadd.f32 %v2013, %v2121
        %v2123 = vpop.f32.mrb[0].mxu0
        %v2124 = vpop.f32.mrb[0].mxu0
        %v2125 = vadd.f32 %v2013, %v2124
        %v2126 = vpop.f32.mrb[0].mxu0
        %2127 = vdwg.mxu0
        %v2128 = vadd.f32 %v2098, %v366
        %v2129 = vadd.f32 %v2101, %v367
        %v2130 = vadd.f32 %v2106, %v368
        %v2131 = vadd.f32 %v2109, %v369
        %v2132 = vadd.f32 %v2114, %v370
        %v2133 = vadd.f32 %v2117, %v371
        %v2134 = vadd.f32 %v2122, %v372
        %v2135 = vadd.f32 %v2125, %v373
        %v2136 = vpack.c.bf16 %v2129, %v2128
        %v2137 = vpack.c.bf16 %v2131, %v2130
        %v2138 = vpack.c.bf16 %v2133, %v2132
        %v2139 = vpack.c.bf16 %v2135, %v2134
        %v2140 = vld [vmem:[#allocation3] sm:$0xf]
        %v2141 = vld [vmem:[#allocation3 + $0x4] sm:$0xf]
        %v2142 = vld [vmem:[#allocation3 + $0x8] sm:$0xf]
        %v2143 = vld [vmem:[#allocation3 + $0xc] sm:$0xf]
        %v2144 = vld [vmem:[#allocation3 + $0x10] sm:$0xf]
        %v2145 = vld [vmem:[#allocation3 + $0x14] sm:$0xf]
        %v2146 = vld [vmem:[#allocation3 + $0x18] sm:$0xf]
        %v2147 = vld [vmem:[#allocation3 + $0x1c] sm:$0xf]
        %v2148 = vld [vmem:[#allocation3 + $0x20] sm:$0xf]
        %v2149 = vld [vmem:[#allocation3 + $0x24] sm:$0xf]
        %v2150 = vld [vmem:[#allocation3 + $0x28] sm:$0xf]
        %v2151 = vld [vmem:[#allocation3 + $0x2c] sm:$0xf]
        %v2152 = vld [vmem:[#allocation3 + $0x30] sm:$0xf]
        %v2153 = vld [vmem:[#allocation3 + $0x34] sm:$0xf]
        %v2154 = vld [vmem:[#allocation3 + $0x38] sm:$0xf]
        %v2155 = vld [vmem:[#allocation3 + $0x3c] sm:$0xf]
        %v2172 = vunpack.c.l.b16 %v2140
        %v2173 = vunpack.c.l.b16 %v2141
        %v2174 = vunpack.c.l.b16 %v2142
        %v2175 = vunpack.c.l.b16 %v2143
        %v2176 = vunpack.c.l.b16 %v2144
        %v2177 = vunpack.c.l.b16 %v2145
        %v2178 = vunpack.c.l.b16 %v2146
        %v2179 = vunpack.c.l.b16 %v2147
        %v2180 = vunpack.c.l.b16 %v2148
        %v2181 = vunpack.c.l.b16 %v2149
        %v2182 = vunpack.c.l.b16 %v2150
        %v2183 = vunpack.c.l.b16 %v2151
        %v2184 = vunpack.c.l.b16 %v2152
        %v2185 = vunpack.c.l.b16 %v2153
        %v2186 = vunpack.c.l.b16 %v2154
        %v2187 = vunpack.c.l.b16 %v2155
        %v2188 = vpack.c.b16 %v2173, %v2172
        %v2189 = vpack.c.b16 %v2175, %v2174
        %v2190 = vpack.c.b16 %v2177, %v2176
        %v2191 = vpack.c.b16 %v2179, %v2178
        %v2192 = vpack.c.b16 %v2181, %v2180
        %v2193 = vpack.c.b16 %v2183, %v2182
        %v2194 = vpack.c.b16 %v2185, %v2184
        %v2195 = vpack.c.b16 %v2187, %v2186
        %2204 = vmatprep.subr.bf16.mxu0 0
        %2205 = vmatpush1.bf16.msra.mxu0 %v2188
        %2206 = vmatprep.subr.bf16.mxu0 0
        %2207 = vmatpush1.bf16.msra.mxu0 %v2189
        %2208 = vmatprep.subr.bf16.mxu0 0
        %2209 = vmatpush1.bf16.msra.mxu0 %v2190
        %2210 = vmatprep.subr.bf16.mxu0 0
        %2211 = vmatpush1.bf16.msra.mxu0 %v2191
        %2212 = vmatprep.subr.bf16.mxu0 0
        %2213 = vmatpush1.bf16.msra.mxu0 %v2192
        %2214 = vmatprep.subr.bf16.mxu0 0
        %2215 = vmatpush1.bf16.msra.mxu0 %v2193
        %2216 = vmatprep.subr.bf16.mxu0 0
        %2217 = vmatpush1.bf16.msra.mxu0 %v2194
        %2218 = vmatprep.subr.bf16.mxu0 0
        %2219 = vmatpush1.bf16.msra.mxu0 %v2195
        %2220 = vmatprep.subr.bf16.mxu0 0
        %2221 = vmatpush1.bf16.msra.mxu0 0
        %2222 = vmatprep.subr.bf16.mxu0 0
        %2223 = vmatpush1.bf16.msra.mxu0 0
        %2224 = vmatprep.subr.bf16.mxu0 0
        %2225 = vmatpush1.bf16.msra.mxu0 0
        %2226 = vmatprep.subr.bf16.mxu0 0
        %2227 = vmatpush1.bf16.msra.mxu0 0
        %2228 = vmatprep.subr.bf16.mxu0 0
        %2229 = vmatpush1.bf16.msra.mxu0 0
        %2230 = vmatprep.subr.bf16.mxu0 0
        %2231 = vmatpush1.bf16.msra.mxu0 0
        %2232 = vmatprep.subr.bf16.mxu0 0
        %2233 = vmatpush1.bf16.msra.mxu0 0
        %2234 = vmatprep.subr.bf16.mxu0 0
        %2235 = vmatpush1.bf16.msra.mxu0 0
        %2236 = vmatprep.mubr.bf16.mxu0 0
        %2237 = vmatmul.mubr.bf16.gmra.mrb[0].mxu0 %v2136
        %v2238 = vpop.f32.mrb[0].mxu0
        %v2239 = vadd.f32 0.0, %v2238
        %v2240 = vpop.f32.mrb[0].mxu0
        %v2241 = vpop.f32.mrb[0].mxu0
        %v2242 = vadd.f32 0.0, %v2241
        %v2243 = vpop.f32.mrb[0].mxu0
        %2244 = vmatprep.mubr.bf16.mxu0 0
        %2245 = vmatmul.mubr.bf16.gmra.mrb[0].mxu0 %v2137
        %v2246 = vpop.f32.mrb[0].mxu0
        %v2247 = vadd.f32 0.0, %v2246
        %v2248 = vpop.f32.mrb[0].mxu0
        %v2249 = vpop.f32.mrb[0].mxu0
        %v2250 = vadd.f32 0.0, %v2249
        %v2251 = vpop.f32.mrb[0].mxu0
        %2252 = vmatprep.mubr.bf16.mxu0 0
        %2253 = vmatmul.mubr.bf16.gmra.mrb[0].mxu0 %v2138
        %v2254 = vpop.f32.mrb[0].mxu0
        %v2255 = vadd.f32 0.0, %v2254
        %v2256 = vpop.f32.mrb[0].mxu0
        %v2257 = vpop.f32.mrb[0].mxu0
        %v2258 = vadd.f32 0.0, %v2257
        %v2259 = vpop.f32.mrb[0].mxu0
        %2260 = vmatprep.mubr.bf16.mxu0 0
        %2261 = vmatmul.mubr.bf16.gmra.mrb[0].mxu0 %v2139
        %v2262 = vpop.f32.mrb[0].mxu0
        %v2263 = vadd.f32 0.0, %v2262
        %v2264 = vpop.f32.mrb[0].mxu0
        %v2265 = vpop.f32.mrb[0].mxu0
        %v2266 = vadd.f32 0.0, %v2265
        %v2267 = vpop.f32.mrb[0].mxu0
        %2268 = vdwg.mxu0
        %v2269 = vpack.c.bf16 %v2242, %v2239
        %v2270 = vpack.c.bf16 %v2250, %v2247
        %v2271 = vpack.c.bf16 %v2258, %v2255
        %v2272 = vpack.c.bf16 %v2266, %v2263
        %v2273 = vld [vmem:[#allocation5] sm:$0xf]
        %v2274 = vld [vmem:[#allocation5 + $0x4] sm:$0xf]
        %v2275 = vld [vmem:[#allocation5 + $0x8] sm:$0xf]
        %v2276 = vld [vmem:[#allocation5 + $0xc] sm:$0xf]
        %v2277 = vld [vmem:[#allocation5 + $0x10] sm:$0xf]
        %v2278 = vld [vmem:[#allocation5 + $0x14] sm:$0xf]
        %v2279 = vld [vmem:[#allocation5 + $0x18] sm:$0xf]
        %v2280 = vld [vmem:[#allocation5 + $0x1c] sm:$0xf]
        %v2281 = vld [vmem:[#allocation5 + $0x20] sm:$0xf]
        %v2282 = vld [vmem:[#allocation5 + $0x24] sm:$0xf]
        %v2283 = vld [vmem:[#allocation5 + $0x28] sm:$0xf]
        %v2284 = vld [vmem:[#allocation5 + $0x2c] sm:$0xf]
        %v2285 = vld [vmem:[#allocation5 + $0x30] sm:$0xf]
        %v2286 = vld [vmem:[#allocation5 + $0x34] sm:$0xf]
        %v2287 = vld [vmem:[#allocation5 + $0x38] sm:$0xf]
        %v2288 = vld [vmem:[#allocation5 + $0x3c] sm:$0xf]
        %v2305 = vunpack.c.l.b16 %v2273
        %v2306 = vunpack.c.l.b16 %v2274
        %v2307 = vunpack.c.l.b16 %v2275
        %v2308 = vunpack.c.l.b16 %v2276
        %v2309 = vunpack.c.l.b16 %v2277
        %v2310 = vunpack.c.l.b16 %v2278
        %v2311 = vunpack.c.l.b16 %v2279
        %v2312 = vunpack.c.l.b16 %v2280
        %v2313 = vunpack.c.l.b16 %v2281
        %v2314 = vunpack.c.l.b16 %v2282
        %v2315 = vunpack.c.l.b16 %v2283
        %v2316 = vunpack.c.l.b16 %v2284
        %v2317 = vunpack.c.l.b16 %v2285
        %v2318 = vunpack.c.l.b16 %v2286
        %v2319 = vunpack.c.l.b16 %v2287
        %v2320 = vunpack.c.l.b16 %v2288
        %v2321 = vpack.c.b16 %v2306, %v2305
        %v2322 = vpack.c.b16 %v2308, %v2307
        %v2323 = vpack.c.b16 %v2310, %v2309
        %v2324 = vpack.c.b16 %v2312, %v2311
        %v2325 = vpack.c.b16 %v2314, %v2313
        %v2326 = vpack.c.b16 %v2316, %v2315
        %v2327 = vpack.c.b16 %v2318, %v2317
        %v2328 = vpack.c.b16 %v2320, %v2319
        %2337 = vmatprep.subr.bf16.mxu0 0
        %2338 = vmatpush1.bf16.msra.mxu0 %v2321
        %2339 = vmatprep.subr.bf16.mxu0 0
        %2340 = vmatpush1.bf16.msra.mxu0 %v2322
        %2341 = vmatprep.subr.bf16.mxu0 0
        %2342 = vmatpush1.bf16.msra.mxu0 %v2323
        %2343 = vmatprep.subr.bf16.mxu0 0
        %2344 = vmatpush1.bf16.msra.mxu0 %v2324
        %2345 = vmatprep.subr.bf16.mxu0 0
        %2346 = vmatpush1.bf16.msra.mxu0 %v2325
        %2347 = vmatprep.subr.bf16.mxu0 0
        %2348 = vmatpush1.bf16.msra.mxu0 %v2326
        %2349 = vmatprep.subr.bf16.mxu0 0
        %2350 = vmatpush1.bf16.msra.mxu0 %v2327
        %2351 = vmatprep.subr.bf16.mxu0 0
        %2352 = vmatpush1.bf16.msra.mxu0 %v2328
        %2353 = vmatprep.subr.bf16.mxu0 0
        %2354 = vmatpush1.bf16.msra.mxu0 0
        %2355 = vmatprep.subr.bf16.mxu0 0
        %2356 = vmatpush1.bf16.msra.mxu0 0
        %2357 = vmatprep.subr.bf16.mxu0 0
        %2358 = vmatpush1.bf16.msra.mxu0 0
        %2359 = vmatprep.subr.bf16.mxu0 0
        %2360 = vmatpush1.bf16.msra.mxu0 0
        %2361 = vmatprep.subr.bf16.mxu0 0
        %2362 = vmatpush1.bf16.msra.mxu0 0
        %2363 = vmatprep.subr.bf16.mxu0 0
        %2364 = vmatpush1.bf16.msra.mxu0 0
        %2365 = vmatprep.subr.bf16.mxu0 0
        %2366 = vmatpush1.bf16.msra.mxu0 0
        %2367 = vmatprep.subr.bf16.mxu0 0
        %2368 = vmatpush1.bf16.msra.mxu0 0
        %2369 = vmatprep.mubr.bf16.mxu0 0
        %2370 = vmatmul.mubr.bf16.gmra.mrb[0].mxu0 %v2269
        %v2371 = vpop.f32.mrb[0].mxu0
        %v2372 = vadd.f32 %v2128, %v2371
        %v2373 = vpop.f32.mrb[0].mxu0
        %v2374 = vpop.f32.mrb[0].mxu0
        %v2375 = vadd.f32 %v2129, %v2374
        %v2376 = vpop.f32.mrb[0].mxu0
        %2377 = vmatprep.mubr.bf16.mxu0 0
        %2378 = vmatmul.mubr.bf16.gmra.mrb[0].mxu0 %v2270
        %v2379 = vpop.f32.mrb[0].mxu0
        %v2380 = vadd.f32 %v2130, %v2379
        %v2381 = vpop.f32.mrb[0].mxu0
        %v2382 = vpop.f32.mrb[0].mxu0
        %v2383 = vadd.f32 %v2131, %v2382
        %v2384 = vpop.f32.mrb[0].mxu0
        %2385 = vmatprep.mubr.bf16.mxu0 0
        %2386 = vmatmul.mubr.bf16.gmra.mrb[0].mxu0 %v2271
        %v2387 = vpop.f32.mrb[0].mxu0
        %v2388 = vadd.f32 %v2132, %v2387
        %v2389 = vpop.f32.mrb[0].mxu0
        %v2390 = vpop.f32.mrb[0].mxu0
        %v2391 = vadd.f32 %v2133, %v2390
        %v2392 = vpop.f32.mrb[0].mxu0
        %2393 = vmatprep.mubr.bf16.mxu0 0
        %2394 = vmatmul.mubr.bf16.gmra.mrb[0].mxu0 %v2272
        %v2395 = vpop.f32.mrb[0].mxu0
        %v2396 = vadd.f32 %v2134, %v2395
        %v2397 = vpop.f32.mrb[0].mxu0
        %v2398 = vpop.f32.mrb[0].mxu0
        %v2399 = vadd.f32 %v2135, %v2398
        %v2400 = vpop.f32.mrb[0].mxu0
        %2401 = vdwg.mxu0
        %2402 = vst [vmem:[%s364] sm:$0xff] %v2372
        %2403 = vst [vmem:[%s364 + $0x8] sm:$0xff] %v2375
        %2404 = vst [vmem:[%s364 + $0x10] sm:$0xff] %v2380
        %2405 = vst [vmem:[%s364 + $0x18] sm:$0xff] %v2383
        %2406 = vst [vmem:[%s364 + $0x20] sm:$0xff] %v2388
        %2407 = vst [vmem:[%s364 + $0x28] sm:$0xff] %v2391
        %2408 = vst [vmem:[%s364 + $0x30] sm:$0xff] %v2396
        %2409 = vst [vmem:[%s364 + $0x38] sm:$0xff] %v2399
        %s2410 = sand.u32 %s180, 1
        %s2411 = sand.u32 %s180, 1
        %s2412 = smul.addr %s2411, 64
        %s2413 = scalar_lea.vmem [#allocation7], %s2412
        // Predicated region
        $region95: #{transformer_layer.1} parent=81 // pred_check
          %p2414 = pneg %p190
        $region96: #{transformer_layer.1} parent=81 // pred_check_branch
          %2416 = sbr.rel (%p2414) target = $region98
        $region97: #{transformer_layer.1} parent=81 // pred_region
          %s2417 = smul.addr %s20, 8
          %s2418 = scalar_lea.vmem %s7, %s2417
          // Predicated region
          $region99: #{transformer_layer.1} parent=97 // pred_check
            _
          $region100: #{transformer_layer.1} parent=97 // pred_check_branch
            %2420 = sbr.rel (0) target = $region102
          $region101: #{transformer_layer.1} parent=97 // pred_region
            // Predicated region
            $region103: #{transformer_layer.1} parent=101 // pred_check
              _
            $region104: #{transformer_layer.1} parent=101 // pred_check_branch
              %2422 = sbr.rel (0) target = $region106
            $region105: #{transformer_layer.1} parent=101 // pred_region
              // Predicated region
              $region118: #{transformer_layer.1} parent=105 // pred_check
                _
              $region119: #{transformer_layer.1} parent=105 // pred_check_branch
                %2451 = sbr.rel (0) target = $region121
              $region120: #{transformer_layer.1} parent=105 // pred_region
                loop: start=0, step=1, limit=1
                $region122: #{transformer_layer.1} parent=120 // loop_pre_header
                  _
                $region123: #{transformer_layer.1} parent=120 // loop_header
                  %s2453 = sphi 0, %s2457
                  %p2454 = scmp.ge.s32.totalorder %s2453, 1
                  %s2458 = sphi %s2413, %s2413
                  %s2459 = sphi %s2418, %s2418
                $region124: #{transformer_layer.1} parent=120 // loop_header_branch
                  %2456 = sbr.rel (%p2454) target = $region128
                $region125: #{transformer_layer.1} parent=120 // loop_body
                  %v2460 = vld [vmem:[%s2458] sm:$0xff]
                  %2461 = vst [vmem:[%s2459] sm:$0xff] %v2460
                  %v2462 = vld [vmem:[%s2458 + $0x8] sm:$0xff]
                  %2463 = vst [vmem:[%s2459 + $0x10] sm:$0xff] %v2462
                  %v2464 = vld [vmem:[%s2458 + $0x10] sm:$0xff]
                  %2465 = vst [vmem:[%s2459 + $0x20] sm:$0xff] %v2464
                  %v2466 = vld [vmem:[%s2458 + $0x18] sm:$0xff]
                  %2467 = vst [vmem:[%s2459 + $0x30] sm:$0xff] %v2466
                  %v2468 = vld [vmem:[%s2458 + $0x20] sm:$0xff]
                  %2469 = vst [vmem:[%s2459 + $0x40] sm:$0xff] %v2468
                  %v2470 = vld [vmem:[%s2458 + $0x28] sm:$0xff]
                  %2471 = vst [vmem:[%s2459 + $0x50] sm:$0xff] %v2470
                  %v2472 = vld [vmem:[%s2458 + $0x30] sm:$0xff]
                  %2473 = vst [vmem:[%s2459 + $0x60] sm:$0xff] %v2472
                  %v2474 = vld [vmem:[%s2458 + $0x38] sm:$0xff]
                  %2475 = vst [vmem:[%s2459 + $0x70] sm:$0xff] %v2474
                $region126: #{transformer_layer.1} parent=120 // loop_footer
                  %s2457 = sadd.s32 1, %s2453
                $region127: #{transformer_layer.1} parent=120 // loop_footer_branch
                  %2452 = sbr.rel target = $region123
                $region128: #{transformer_layer.1} parent=120 // loop_exit
                  _
              $region121: #{transformer_layer.1} parent=105 // pred_fallthru
                _
              // Predicated region
              $region129: #{transformer_layer.1} parent=105 // pred_check
                _
              $region130: #{transformer_layer.1} parent=105 // pred_check_branch
                %2477 = sbr.rel target = $region132
              $region131: #{transformer_layer.1} parent=105 // pred_region
                _
              $region132: #{transformer_layer.1} parent=105 // pred_fallthru
                _
            $region106: #{transformer_layer.1} parent=101 // pred_fallthru
              _
            // Predicated region
            $region107: #{transformer_layer.1} parent=101 // pred_check
              _
            $region108: #{transformer_layer.1} parent=101 // pred_check_branch
              %2424 = sbr.rel target = $region110
            $region109: #{transformer_layer.1} parent=101 // pred_region
              loop: start=0, step=1, limit=1
              $region111: #{transformer_layer.1} parent=109 // loop_pre_header
                _
              $region112: #{transformer_layer.1} parent=109 // loop_header
                %s2427 = sphi 0, %s2431
                %p2428 = scmp.ge.s32.totalorder %s2427, 1
                %s2432 = sphi %s2413, %s2413
                %s2433 = sphi %s2418, %s2418
              $region113: #{transformer_layer.1} parent=109 // loop_header_branch
                %2430 = sbr.rel (%p2428) target = $region117
              $region114: #{transformer_layer.1} parent=109 // loop_body
                %v2434 = vld [vmem:[%s2432] sm:$0xff]
                %2435 = vst [vmem:[%s2433] sm:$0xff] %v2434
                %v2436 = vld [vmem:[%s2432 + $0x8] sm:$0xff]
                %2437 = vst [vmem:[%s2433 + $0x10] sm:$0xff] %v2436
                %v2438 = vld [vmem:[%s2432 + $0x10] sm:$0xff]
                %2439 = vst [vmem:[%s2433 + $0x20] sm:$0xff] %v2438
                %v2440 = vld [vmem:[%s2432 + $0x18] sm:$0xff]
                %2441 = vst [vmem:[%s2433 + $0x30] sm:$0xff] %v2440
                %v2442 = vld [vmem:[%s2432 + $0x20] sm:$0xff]
                %2443 = vst [vmem:[%s2433 + $0x40] sm:$0xff] %v2442
                %v2444 = vld [vmem:[%s2432 + $0x28] sm:$0xff]
                %2445 = vst [vmem:[%s2433 + $0x50] sm:$0xff] %v2444
                %v2446 = vld [vmem:[%s2432 + $0x30] sm:$0xff]
                %2447 = vst [vmem:[%s2433 + $0x60] sm:$0xff] %v2446
                %v2448 = vld [vmem:[%s2432 + $0x38] sm:$0xff]
                %2449 = vst [vmem:[%s2433 + $0x70] sm:$0xff] %v2448
              $region115: #{transformer_layer.1} parent=109 // loop_footer
                %s2431 = sadd.s32 1, %s2427
              $region116: #{transformer_layer.1} parent=109 // loop_footer_branch
                %2426 = sbr.rel target = $region112
              $region117: #{transformer_layer.1} parent=109 // loop_exit
                _
            $region110: #{transformer_layer.1} parent=101 // pred_fallthru
              _
          $region102: #{transformer_layer.1} parent=97 // pred_fallthru
            _
          %2478 = vnop
        $region98: #{transformer_layer.1} parent=81 // pred_fallthru
          _
      $region82: #{transformer_layer.1} parent=5 // pred_fallthru
        _
      %p2479 = scmp.le.s32.totalorder 2, %s15
      // Predicated region
      $region133: #{transformer_layer.1} parent=5 // pred_check
        %p2480 = pneg %p2479
      $region134: #{transformer_layer.1} parent=5 // pred_check_branch
        %2482 = sbr.rel (%p2480) target = $region136
      $region135: #{transformer_layer.1} parent=5 // pred_region
        %s2483 = ssub.s32 %s15, 2
        // Predicated region
        $region137: #{transformer_layer.1} parent=135 // pred_check
          %p2484 = pneg %p196
        $region138: #{transformer_layer.1} parent=135 // pred_check_branch
          %2486 = sbr.rel (%p2484) target = $region140
        $region139: #{transformer_layer.1} parent=135 // pred_region
          %s2487 = sand.u32 %s181, 1
          %s2488 = sand.u32 %s181, 1
          %s2489 = smul.addr %s2488, 64
          %s2490 = scalar_lea.vmem [#allocation7], %s2489
        $region140: #{transformer_layer.1} parent=135 // pred_fallthru
          _
      $region136: #{transformer_layer.1} parent=5 // pred_fallthru
        _
    $region6: #{transformer_layer.1} parent=1 // loop_footer
      %s19 = sadd.s32 1, %s15
    $region7: #{transformer_layer.1} parent=1 // loop_footer_branch
      %14 = sbr.rel target = $region3
    $region8: #{transformer_layer.1} parent=1 // loop_exit
      _
    %2491 = vsyncpa [#allocation4], 1
    %s2492 = scalar_lea.sflag [#allocation4], 1
    %2493 = vsyncpa %s2492, 1
    %2494 = vsyncpa [#allocation6], 1

</llo_original>
